<compile_context>
chip_gen: v5e
topology: v5e:2x2
jax: 0.10.0
libtpu: 0.0.40
codegen_flags: <defaults>
</compile_context>

<pallas_src>
import functools
import math

import jax
import jax.numpy as jnp
from jax.experimental import pallas as pl
from jax.experimental.pallas import tpu as pltpu

NEG_INF = -1e30
LN_EPS = 1e-5                      # PyTorch LayerNorm default eps
COMPUTE_DTYPE = jnp.bfloat16       # MXU-native input dtype (f32 accumulation)


def _vmem_limit_bytes():
    cap = 64 * 1024 * 1024
    try:
        info = pltpu.get_tpu_info()
        cap = int(getattr(info, "vmem_capacity_bytes", cap))
    except Exception:
        pass
    # leave headroom for Mosaic internal scratch; ~56 MiB on v7x, 100 MiB on v5e/v6e
    return int(min(cap - cap // 8, 100 * 1024 * 1024))


_VMEM_LIMIT = _vmem_limit_bytes()


def _layer_norm(x, gamma, beta):
    mu = jnp.mean(x, axis=-1, keepdims=True)
    c = x - mu
    var = jnp.mean(c * c, axis=-1, keepdims=True)
    return c * jax.lax.rsqrt(var + LN_EPS) * gamma + beta


def _choose_block_batch(batch, seq):
    """Largest Bt dividing batch with Bt*seq ~<= 256 while keeping >=2 grid steps."""
    target = max(1, -(-256 // seq))           # ceil(256 / seq)
    best = 1
    for bt in range(1, batch + 1):
        if batch % bt == 0 and bt <= target and (batch // bt >= 2 or batch == 1):
            best = bt
    return best


# --------------------------------------------------------------------------
# Kernel 1: one post-norm TransformerEncoderLayer for a block of Bt sequences.
# When `pool` is True (last layer) the kernel also does the masked mean-pool
# and emits only the pooled [Bt, 1, D] rows.
# --------------------------------------------------------------------------
def _encoder_layer_kernel(*refs, n_head, pool):
    if pool:
        (x_ref, bias_ref, mask_ref, wqkv_ref, bqkv_ref, wo_ref, bo_ref,
         ln1g_ref, ln1b_ref, w1_ref, b1_ref, w2_ref, b2_ref,
         ln2g_ref, ln2b_ref, o_ref) = refs
    else:
        (x_ref, bias_ref, wqkv_ref, bqkv_ref, wo_ref, bo_ref,
         ln1g_ref, ln1b_ref, w1_ref, b1_ref, w2_ref, b2_ref,
         ln2g_ref, ln2b_ref, o_ref) = refs
        mask_ref = None

    bt, S, D = x_ref.shape
    dh = D // n_head
    cdt = COMPUTE_DTYPE

    x = x_ref[...].astype(jnp.float32)                         # [bt, S, D]
    bias = bias_ref[...]                                       # [bt, 1, S]
    flat = x.reshape(bt * S, D)                                 # f32 residual copy

    # ---- fused QKV projection (scale already folded into the Q columns) ----
    qkv = jnp.dot(flat.astype(cdt), wqkv_ref[...],
                  preferred_element_type=jnp.float32) + bqkv_ref[...]   # [bt*S, 3D]

    # ---- per (sequence, head) scores / softmax / context ----
    ctx_rows = []
    for b in range(bt):
        r0 = b * S
        qkv_b = qkv[r0:r0 + S]                                  # [S, 3D]
        bias_b = bias[b]                                        # [1, S]
        heads = []
        for h in range(n_head):
            c0 = h * dh
            qh = qkv_b[:, c0:c0 + dh].astype(cdt)
            kh = qkv_b[:, D + c0:D + c0 + dh].astype(cdt)
            vh = qkv_b[:, 2 * D + c0:2 * D + c0 + dh].astype(cdt)
            s = jax.lax.dot_general(qh, kh, (((1,), (1,)), ((), ())),
                                    preferred_element_type=jnp.float32)
            s = s + bias_b                                      # key-padding bias
            s = s - jnp.max(s, axis=-1, keepdims=True)
            p = jnp.exp(s)
            p = p * pl.reciprocal(jnp.sum(p, axis=-1, keepdims=True), approx=True)
            heads.append(jnp.dot(p.astype(cdt), vh,
                                 preferred_element_type=jnp.float32))   # [S, dh]
        ctx_rows.append(jnp.concatenate(heads, axis=-1))        # [S, D]
    ctx = jnp.concatenate(ctx_rows, axis=0) if bt > 1 else ctx_rows[0]  # [bt*S, D]

    # ---- fused out-projection, residual + LayerNorm1 (post-norm) ----
    attn = jnp.dot(ctx.astype(cdt), wo_ref[...],
                   preferred_element_type=jnp.float32) + bo_ref[...]
    h1 = _layer_norm(flat + attn, ln1g_ref[...], ln1b_ref[...])

    # ---- feed-forward (relu) + residual + LayerNorm2 ----
    f = jnp.dot(h1.astype(cdt), w1_ref[...],
                preferred_element_type=jnp.float32) + b1_ref[...]
    f = jnp.maximum(f, 0.0)
    f = jnp.dot(f.astype(cdt), w2_ref[...],
                preferred_element_type=jnp.float32) + b2_ref[...]
    out = _layer_norm(h1 + f, ln2g_ref[...], ln2b_ref[...])     # [bt*S, D]

    if pool:
        # masked mean pool fused into the last layer's epilogue.
        # NOTE: a fully-padded sequence (sum(mask)=0) would produce inf/NaN,
        # matching the undefined PyTorch behaviour for that case.
        mask = mask_ref[...]                                    # [bt, 1, S]
        for b in range(bt):
            mb = mask[b]                                        # [1, S]
            ob = out[b * S:(b + 1) * S, :]                      # [S, D]
            pooled = jnp.dot(mb, ob, preferred_element_type=jnp.float32)  # [1, D]
            denom = jnp.sum(mb, axis=-1, keepdims=True)         # [1, 1]
            pooled = pooled * pl.reciprocal(denom, approx=True)
            o_ref[b] = pooled.astype(o_ref.dtype)
    else:
        o_ref[...] = out.reshape(bt, S, D).astype(o_ref.dtype)


def _encoder_layer(x, key_bias, mask_f, p, *, n_head, bt, pool):
    B, S, D = x.shape
    d_ff = p["w1"].shape[1]

    def rep(shape):
        # grid-invariant (VMEM-resident) full block
        return pl.BlockSpec(shape, lambda b: (0,) * len(shape))

    in_specs = [
        pl.BlockSpec((bt, S, D), lambda b: (b, 0, 0)),          # x (streamed)
        pl.BlockSpec((bt, 1, S), lambda b: (b, 0, 0)),          # key-padding bias
    ]
    operands = [x, key_bias]
    if pool:
        in_specs.append(pl.BlockSpec((bt, 1, S), lambda b: (b, 0, 0)))  # mask (0/1)
        operands.append(mask_f)
    in_specs += [
        rep((D, 3 * D)), rep((1, 3 * D)),                       # wqkv, bqkv
        rep((D, D)), rep((1, D)),                               # wo, bo
        rep((1, D)), rep((1, D)),                               # ln1 gamma/beta
        rep((D, d_ff)), rep((1, d_ff)),                         # w1, b1
        rep((d_ff, D)), rep((1, D)),                            # w2, b2
        rep((1, D)), rep((1, D)),                               # ln2 gamma/beta
    ]
    operands += [p["wqkv"], p["bqkv"], p["wo"], p["bo"], p["ln1_g"], p["ln1_b"],
                 p["w1"], p["b1"], p["w2"], p["b2"], p["ln2_g"], p["ln2_b"]]

    if pool:
        out_shape = jax.ShapeDtypeStruct((B, 1, D), jnp.float32)
        out_specs = pl.BlockSpec((bt, 1, D), lambda b: (b, 0, 0))
    else:
        out_shape = jax.ShapeDtypeStruct((B, S, D), jnp.float32)
        out_specs = pl.BlockSpec((bt, S, D), lambda b: (b, 0, 0))

    cost = pl.CostEstimate(
        flops=int(2 * B * S * D * (3 * D + D + 2 * d_ff) + 4 * B * S * S * D),
        transcendentals=int(B * n_head * S * S + 2 * B * S),
        bytes_accessed=int(4 * (2 * B * S * D + 2 * B * S)
                           + 2 * (4 * D * D + 2 * D * d_ff)),
    )

    return pl.pallas_call(
        functools.partial(_encoder_layer_kernel, n_head=n_head, pool=pool),
        out_shape=out_shape,
        grid=(B // bt,),
        in_specs=in_specs,
        out_specs=out_specs,
        compiler_params=pltpu.CompilerParams(
            dimension_semantics=("parallel",),
            vmem_limit_bytes=_VMEM_LIMIT),
        cost_estimate=cost,
    )(*operands)


# --------------------------------------------------------------------------
# Kernel 2: final nn.Linear as one well-shaped [B, D] x [D, d_out] matmul.
# --------------------------------------------------------------------------
def _final_linear_kernel(x_ref, w_ref, b_ref, o_ref):
    y = jnp.dot(x_ref[...].astype(COMPUTE_DTYPE), w_ref[...],
                preferred_element_type=jnp.float32) + b_ref[...]
    o_ref[...] = y.astype(o_ref.dtype)


def _final_linear(pooled, wf, bf):
    B, D = pooled.shape
    d_out = wf.shape[1]
    return pl.pallas_call(
        _final_linear_kernel,
        out_shape=jax.ShapeDtypeStruct((B, d_out), jnp.float32),
        grid=(1,),
        in_specs=[
            pl.BlockSpec((B, D), lambda i: (0, 0)),
            pl.BlockSpec((D, d_out), lambda i: (0, 0)),
            pl.BlockSpec((1, d_out), lambda i: (0, 0)),
        ],
        out_specs=pl.BlockSpec((B, d_out), lambda i: (0, 0)),
        compiler_params=pltpu.CompilerParams(
            dimension_semantics=("arbitrary",),
            vmem_limit_bytes=_VMEM_LIMIT),
    )(pooled, wf, bf)


# --------------------------------------------------------------------------
# Param prep: fuse QKV (scale folded into Q), cast matmul weights to bf16.
# --------------------------------------------------------------------------
def _prepare_kernel_params(params, *, n_head):
    cdt = COMPUTE_DTYPE
    layers = []
    for p in params["layers"]:
        D = p["wq"].shape[0]
        scale = 1.0 / math.sqrt(D // n_head)
        wqkv = jnp.concatenate([p["wq"] * scale, p["wk"], p["wv"]], axis=1)
        bqkv = jnp.concatenate([p["bq"] * scale, p["bk"], p["bv"]], axis=1)
        layers.append(dict(
            wqkv=wqkv.astype(cdt), bqkv=bqkv.astype(jnp.float32),
            wo=p["wo"].astype(cdt), bo=p["bo"],
            ln1_g=p["ln1_g"], ln1_b=p["ln1_b"],
            w1=p["w1"].astype(cdt), b1=p["b1"],
            w2=p["w2"].astype(cdt), b2=p["b2"],
            ln2_g=p["ln2_g"], ln2_b=p["ln2_b"]))
    return dict(layers=layers, wf=params["wf"].astype(cdt), bf=params["bf"])


# --------------------------------------------------------------------------
# Full forward (matches TextProjectorV2.forward semantics, eval mode).
# --------------------------------------------------------------------------
def text_projector_v2(emb, mask, params, *, n_head):
    """emb: [B, S, d_model] float32;  mask: [B, S] bool (True = valid token)."""
    B, S, _ = emb.shape
    kp = _prepare_kernel_params(params, n_head=n_head)
    mask_f = mask.astype(jnp.float32)[:, None, :]                          # [B,1,S]
    key_bias = jnp.where(mask, 0.0, NEG_INF).astype(jnp.float32)[:, None, :]
    bt = _choose_block_batch(B, S)

    x = emb.astype(jnp.float32)
    n_layers = len(kp["layers"])
    for li, lp in enumerate(kp["layers"]):
        last = (li == n_layers - 1)
        x = _encoder_layer(x, key_bias, mask_f, lp, n_head=n_head, bt=bt, pool=last)
    pooled = x[:, 0, :]                                                    # [B, D]
    return _final_linear(pooled, kp["wf"], kp["bf"])


# --------------------------------------------------------------------------
# Synthetic parameters (values rounded to bf16-representable so the f32
# reference and the bf16-weight kernels see identical weight values).
# --------------------------------------------------------------------------
def init_params(key, conf):
    D, F = conf["d_model"], conf["d_inner"]
    O, L = conf["d_output"], conf["n_layer"]

    def normal(k, shape, scale=0.05):
        w = scale * jax.random.normal(k, shape, jnp.float32)
        return w.astype(jnp.bfloat16).astype(jnp.float32)

    layers = []
    keys = jax.random.split(key, L + 1)
    for lk in keys[:L]:
        k = jax.random.split(lk, 16)
        layers.append(dict(
            wq=normal(k[0], (D, D)), bq=normal(k[1], (1, D)),
            wk=normal(k[2], (D, D)), bk=normal(k[3], (1, D)),
            wv=normal(k[4], (D, D)), bv=normal(k[5], (1, D)),
            wo=normal(k[6], (D, D)), bo=normal(k[7], (1, D)),
            w1=normal(k[8], (D, F)), b1=normal(k[9], (1, F)),
            w2=normal(k[10], (F, D)), b2=normal(k[11], (1, D)),
            ln1_g=1.0 + normal(k[12], (1, D), 0.1), ln1_b=normal(k[13], (1, D), 0.1),
            ln2_g=1.0 + normal(k[14], (1, D), 0.1), ln2_b=normal(k[15], (1, D), 0.1)))
    kf, kb = jax.random.split(keys[-1])
    return dict(layers=layers, wf=normal(kf, (D, O)), bf=normal(kb, (1, O)))


# --------------------------------------------------------------------------
# Pure-JAX f32 reference (PyTorch TransformerEncoder post-norm, relu, eval).
# --------------------------------------------------------------------------
def _reference(emb, mask, params, *, n_head):
    B, S, D = emb.shape
    dh = D // n_head
    mask_f = mask.astype(jnp.float32)
    bias = jnp.where(mask, 0.0, NEG_INF)[:, None, None, :]
    x = emb

    def split(t):
        return t.reshape(B, S, n_head, dh).transpose(0, 2, 1, 3)

    for p in params["layers"]:
        q = split(x @ p["wq"] + p["bq"])
        k = split(x @ p["wk"] + p["bk"])
        v = split(x @ p["wv"] + p["bv"])
        s = jnp.einsum("bhqe,bhke->bhqk", q, k) / math.sqrt(dh) + bias
        a = jax.nn.softmax(s, axis=-1)
        ctx = jnp.einsum("bhqk,bhke->bhqe", a, v).transpose(0, 2, 1, 3).reshape(B, S, D)
        attn = ctx @ p["wo"] + p["bo"]
        h1 = _layer_norm(x + attn, p["ln1_g"], p["ln1_b"])
        f = jnp.maximum(h1 @ p["w1"] + p["b1"], 0.0) @ p["w2"] + p["b2"]
        x = _layer_norm(h1 + f, p["ln2_g"], p["ln2_b"])
    x = x * mask_f[:, :, None]
    pooled = x.sum(axis=1) / mask_f.sum(axis=1, keepdims=True)
    return pooled @ params["wf"] + params["bf"]


if __name__ == "__main__":
    conf = dict(d_model=32, n_head=4, d_inner=64, dropout=0.0,
                activation="relu", n_layer=2, d_output=32)
    batch, seq = 2, 8

    key = jax.random.PRNGKey(0)
    k_emb, k_par = jax.random.split(key)
    emb = jax.random.normal(k_emb, (batch, seq, conf["d_model"]), jnp.float32)
    lengths = jnp.array([seq, 5], dtype=jnp.int32)           # 2nd sequence padded
    mask = jnp.arange(seq)[None, :] < lengths[:, None]       # [B, S] bool

    params = init_params(k_par, conf)

    out = text_projector_v2(emb, mask, params, n_head=conf["n_head"])
    out = jax.block_until_ready(out)

    ref = _reference(emb, mask, params, n_head=conf["n_head"])
    assert out.shape == (batch, conf["d_output"])
    assert bool(jnp.all(jnp.isfinite(out)))
    max_diff = float(jnp.max(jnp.abs(out - ref)))
    # bf16 matmul inputs + approx reciprocals => small deviation from f32 ref.
    assert jnp.allclose(out, ref, atol=3e-2, rtol=3e-2), (
        f"mismatch vs pure-JAX reference: max abs diff = {max_diff}")
    print("KERNEL_OK")
</pallas_src>

<mosaic_0001>
module attributes {stable_mosaic.version = 11 : i64} {
  func.func @_encoder_layer_kernel(%arg0: i32, %arg1: memref<1x8x32xf32, #tpu.memory_space<vmem>>, %arg2: memref<1x1x8xf32, #tpu.memory_space<vmem>>, %arg3: memref<32x96xbf16, #tpu.memory_space<vmem>>, %arg4: memref<1x96xf32, #tpu.memory_space<vmem>>, %arg5: memref<32x32xbf16, #tpu.memory_space<vmem>>, %arg6: memref<1x32xf32, #tpu.memory_space<vmem>>, %arg7: memref<1x32xf32, #tpu.memory_space<vmem>>, %arg8: memref<1x32xf32, #tpu.memory_space<vmem>>, %arg9: memref<32x64xbf16, #tpu.memory_space<vmem>>, %arg10: memref<1x64xf32, #tpu.memory_space<vmem>>, %arg11: memref<64x32xbf16, #tpu.memory_space<vmem>>, %arg12: memref<1x32xf32, #tpu.memory_space<vmem>>, %arg13: memref<1x32xf32, #tpu.memory_space<vmem>>, %arg14: memref<1x32xf32, #tpu.memory_space<vmem>>, %arg15: memref<1x8x32xf32, #tpu.memory_space<vmem>>) attributes {dimension_semantics = [#tpu.dimension_semantics<parallel>], iteration_bounds = array<i64: 2>, scalar_prefetch = 0 : i64, scratch_operands = 0 : i64, tpu.core_type = #tpu.core_type<tc>, window_params = [{transform_indices = @transform_0, window_bounds = array<i64: 1, 8, 32>}, {transform_indices = @transform_1, window_bounds = array<i64: 1, 1, 8>}, {pipeline_mode = #tpu.pipeline_mode<synchronous>, transform_indices = @transform_2, window_bounds = array<i64: 32, 96>}, {pipeline_mode = #tpu.pipeline_mode<synchronous>, transform_indices = @transform_3, window_bounds = array<i64: 1, 96>}, {pipeline_mode = #tpu.pipeline_mode<synchronous>, transform_indices = @transform_4, window_bounds = array<i64: 32, 32>}, {pipeline_mode = #tpu.pipeline_mode<synchronous>, transform_indices = @transform_5, window_bounds = array<i64: 1, 32>}, {pipeline_mode = #tpu.pipeline_mode<synchronous>, transform_indices = @transform_6, window_bounds = array<i64: 1, 32>}, {pipeline_mode = #tpu.pipeline_mode<synchronous>, transform_indices = @transform_7, window_bounds = array<i64: 1, 32>}, {pipeline_mode = #tpu.pipeline_mode<synchronous>, transform_indices = @transform_8, window_bounds = array<i64: 32, 64>}, {pipeline_mode = #tpu.pipeline_mode<synchronous>, transform_indices = @transform_9, window_bounds = array<i64: 1, 64>}, {pipeline_mode = #tpu.pipeline_mode<synchronous>, transform_indices = @transform_10, window_bounds = array<i64: 64, 32>}, {pipeline_mode = #tpu.pipeline_mode<synchronous>, transform_indices = @transform_11, window_bounds = array<i64: 1, 32>}, {pipeline_mode = #tpu.pipeline_mode<synchronous>, transform_indices = @transform_12, window_bounds = array<i64: 1, 32>}, {pipeline_mode = #tpu.pipeline_mode<synchronous>, transform_indices = @transform_13, window_bounds = array<i64: 1, 32>}, {transform_indices = @transform_14, window_bounds = array<i64: 1, 8, 32>}]} {
    %c0 = arith.constant 0 : index
    %c0_0 = arith.constant 0 : index
    %c0_1 = arith.constant 0 : index
    %0 = vector.load %arg1[%c0, %c0_0, %c0_1] : memref<1x8x32xf32, #tpu.memory_space<vmem>>, vector<1x8x32xf32>
    %c0_2 = arith.constant 0 : index
    %c0_3 = arith.constant 0 : index
    %c0_4 = arith.constant 0 : index
    %1 = vector.load %arg2[%c0_2, %c0_3, %c0_4] : memref<1x1x8xf32, #tpu.memory_space<vmem>>, vector<1x1x8xf32>
    %2 = vector.shape_cast %0 : vector<1x8x32xf32> to vector<8x32xf32>
    %3 = arith.truncf %2 : vector<8x32xf32> to vector<8x32xbf16>
    %c0_5 = arith.constant 0 : index
    %c0_6 = arith.constant 0 : index
    %4 = vector.load %arg3[%c0_5, %c0_6] : memref<32x96xbf16, #tpu.memory_space<vmem>>, vector<32x96xbf16>
    %cst = arith.constant dense<0.000000e+00> : vector<8x96xf32>
    %5 = tpu.matmul %3, %4, %cst {dimension_numbers = #tpu.dot_dimension_numbers<[1], [0], [0], [1], [0, 0, 1, 1], [], []>} : vector<8x32xbf16>, vector<32x96xbf16>, vector<8x96xf32> -> vector<8x96xf32>
    %c0_7 = arith.constant 0 : index
    %c0_8 = arith.constant 0 : index
    %6 = vector.load %arg4[%c0_7, %c0_8] : memref<1x96xf32, #tpu.memory_space<vmem>>, vector<1x96xf32>
    %7 = vector.broadcast %6 : vector<1x96xf32> to vector<8x96xf32>
    %8 = arith.addf %5, %7 : vector<8x96xf32>
    %9 = vector.shape_cast %1 : vector<1x1x8xf32> to vector<1x8xf32>
    %10 = vector.extract_strided_slice %8 {offsets = [0, 0], sizes = [8, 8], strides = [1, 1]} : vector<8x96xf32> to vector<8x8xf32>
    %11 = arith.truncf %10 : vector<8x8xf32> to vector<8x8xbf16>
    %12 = vector.extract_strided_slice %8 {offsets = [0, 32], sizes = [8, 8], strides = [1, 1]} : vector<8x96xf32> to vector<8x8xf32>
    %13 = arith.truncf %12 : vector<8x8xf32> to vector<8x8xbf16>
    %14 = vector.extract_strided_slice %8 {offsets = [0, 64], sizes = [8, 8], strides = [1, 1]} : vector<8x96xf32> to vector<8x8xf32>
    %15 = arith.truncf %14 : vector<8x8xf32> to vector<8x8xbf16>
    %cst_9 = arith.constant dense<0.000000e+00> : vector<8x8xf32>
    %16 = tpu.matmul %11, %13, %cst_9 {dimension_numbers = #tpu.dot_dimension_numbers<[1], [1], [0], [0], [0, 0, 1, 0], [], []>} : vector<8x8xbf16>, vector<8x8xbf16>, vector<8x8xf32> -> vector<8x8xf32>
    %17 = vector.broadcast %9 : vector<1x8xf32> to vector<8x8xf32>
    %18 = arith.addf %16, %17 : vector<8x8xf32>
    %cst_10 = arith.constant dense<0xFF800000> : vector<8xf32>
    %19 = vector.multi_reduction <maximumf>, %18, %cst_10 [1] : vector<8x8xf32> to vector<8xf32>
    %20 = vector.shape_cast %19 : vector<8xf32> to vector<8x1xf32>
    %21 = vector.broadcast %20 : vector<8x1xf32> to vector<8x8xf32>
    %22 = arith.subf %18, %21 : vector<8x8xf32>
    %23 = math.exp %22 : vector<8x8xf32>
    %cst_11 = arith.constant dense<0.000000e+00> : vector<8xf32>
    %24 = vector.multi_reduction <add>, %23, %cst_11 [1] : vector<8x8xf32> to vector<8xf32>
    %25 = vector.shape_cast %24 : vector<8xf32> to vector<8x1xf32>
    %26 = tpu.reciprocal %25 {approx = true} : vector<8x1xf32> -> vector<8x1xf32>
    %27 = vector.broadcast %26 : vector<8x1xf32> to vector<8x8xf32>
    %28 = arith.mulf %23, %27 : vector<8x8xf32>
    %29 = arith.truncf %28 : vector<8x8xf32> to vector<8x8xbf16>
    %cst_12 = arith.constant dense<0.000000e+00> : vector<8x8xf32>
    %30 = tpu.matmul %29, %15, %cst_12 {dimension_numbers = #tpu.dot_dimension_numbers<[1], [0], [0], [1], [0, 0, 1, 1], [], []>} : vector<8x8xbf16>, vector<8x8xbf16>, vector<8x8xf32> -> vector<8x8xf32>
    %31 = vector.extract_strided_slice %8 {offsets = [0, 8], sizes = [8, 8], strides = [1, 1]} : vector<8x96xf32> to vector<8x8xf32>
    %32 = arith.truncf %31 : vector<8x8xf32> to vector<8x8xbf16>
    %33 = vector.extract_strided_slice %8 {offsets = [0, 40], sizes = [8, 8], strides = [1, 1]} : vector<8x96xf32> to vector<8x8xf32>
    %34 = arith.truncf %33 : vector<8x8xf32> to vector<8x8xbf16>
    %35 = vector.extract_strided_slice %8 {offsets = [0, 72], sizes = [8, 8], strides = [1, 1]} : vector<8x96xf32> to vector<8x8xf32>
    %36 = arith.truncf %35 : vector<8x8xf32> to vector<8x8xbf16>
    %cst_13 = arith.constant dense<0.000000e+00> : vector<8x8xf32>
    %37 = tpu.matmul %32, %34, %cst_13 {dimension_numbers = #tpu.dot_dimension_numbers<[1], [1], [0], [0], [0, 0, 1, 0], [], []>} : vector<8x8xbf16>, vector<8x8xbf16>, vector<8x8xf32> -> vector<8x8xf32>
    %38 = vector.broadcast %9 : vector<1x8xf32> to vector<8x8xf32>
    %39 = arith.addf %37, %38 : vector<8x8xf32>
    %cst_14 = arith.constant dense<0xFF800000> : vector<8xf32>
    %40 = vector.multi_reduction <maximumf>, %39, %cst_14 [1] : vector<8x8xf32> to vector<8xf32>
    %41 = vector.shape_cast %40 : vector<8xf32> to vector<8x1xf32>
    %42 = vector.broadcast %41 : vector<8x1xf32> to vector<8x8xf32>
    %43 = arith.subf %39, %42 : vector<8x8xf32>
    %44 = math.exp %43 : vector<8x8xf32>
    %cst_15 = arith.constant dense<0.000000e+00> : vector<8xf32>
    %45 = vector.multi_reduction <add>, %44, %cst_15 [1] : vector<8x8xf32> to vector<8xf32>
    %46 = vector.shape_cast %45 : vector<8xf32> to vector<8x1xf32>
    %47 = tpu.reciprocal %46 {approx = true} : vector<8x1xf32> -> vector<8x1xf32>
    %48 = vector.broadcast %47 : vector<8x1xf32> to vector<8x8xf32>
    %49 = arith.mulf %44, %48 : vector<8x8xf32>
    %50 = arith.truncf %49 : vector<8x8xf32> to vector<8x8xbf16>
    %cst_16 = arith.constant dense<0.000000e+00> : vector<8x8xf32>
    %51 = tpu.matmul %50, %36, %cst_16 {dimension_numbers = #tpu.dot_dimension_numbers<[1], [0], [0], [1], [0, 0, 1, 1], [], []>} : vector<8x8xbf16>, vector<8x8xbf16>, vector<8x8xf32> -> vector<8x8xf32>
    %52 = vector.extract_strided_slice %8 {offsets = [0, 16], sizes = [8, 8], strides = [1, 1]} : vector<8x96xf32> to vector<8x8xf32>
    %53 = arith.truncf %52 : vector<8x8xf32> to vector<8x8xbf16>
    %54 = vector.extract_strided_slice %8 {offsets = [0, 48], sizes = [8, 8], strides = [1, 1]} : vector<8x96xf32> to vector<8x8xf32>
    %55 = arith.truncf %54 : vector<8x8xf32> to vector<8x8xbf16>
    %56 = vector.extract_strided_slice %8 {offsets = [0, 80], sizes = [8, 8], strides = [1, 1]} : vector<8x96xf32> to vector<8x8xf32>
    %57 = arith.truncf %56 : vector<8x8xf32> to vector<8x8xbf16>
    %cst_17 = arith.constant dense<0.000000e+00> : vector<8x8xf32>
    %58 = tpu.matmul %53, %55, %cst_17 {dimension_numbers = #tpu.dot_dimension_numbers<[1], [1], [0], [0], [0, 0, 1, 0], [], []>} : vector<8x8xbf16>, vector<8x8xbf16>, vector<8x8xf32> -> vector<8x8xf32>
    %59 = vector.broadcast %9 : vector<1x8xf32> to vector<8x8xf32>
    %60 = arith.addf %58, %59 : vector<8x8xf32>
    %cst_18 = arith.constant dense<0xFF800000> : vector<8xf32>
    %61 = vector.multi_reduction <maximumf>, %60, %cst_18 [1] : vector<8x8xf32> to vector<8xf32>
    %62 = vector.shape_cast %61 : vector<8xf32> to vector<8x1xf32>
    %63 = vector.broadcast %62 : vector<8x1xf32> to vector<8x8xf32>
    %64 = arith.subf %60, %63 : vector<8x8xf32>
    %65 = math.exp %64 : vector<8x8xf32>
    %cst_19 = arith.constant dense<0.000000e+00> : vector<8xf32>
    %66 = vector.multi_reduction <add>, %65, %cst_19 [1] : vector<8x8xf32> to vector<8xf32>
    %67 = vector.shape_cast %66 : vector<8xf32> to vector<8x1xf32>
    %68 = tpu.reciprocal %67 {approx = true} : vector<8x1xf32> -> vector<8x1xf32>
    %69 = vector.broadcast %68 : vector<8x1xf32> to vector<8x8xf32>
    %70 = arith.mulf %65, %69 : vector<8x8xf32>
    %71 = arith.truncf %70 : vector<8x8xf32> to vector<8x8xbf16>
    %cst_20 = arith.constant dense<0.000000e+00> : vector<8x8xf32>
    %72 = tpu.matmul %71, %57, %cst_20 {dimension_numbers = #tpu.dot_dimension_numbers<[1], [0], [0], [1], [0, 0, 1, 1], [], []>} : vector<8x8xbf16>, vector<8x8xbf16>, vector<8x8xf32> -> vector<8x8xf32>
    %73 = vector.extract_strided_slice %8 {offsets = [0, 24], sizes = [8, 8], strides = [1, 1]} : vector<8x96xf32> to vector<8x8xf32>
    %74 = arith.truncf %73 : vector<8x8xf32> to vector<8x8xbf16>
    %75 = vector.extract_strided_slice %8 {offsets = [0, 56], sizes = [8, 8], strides = [1, 1]} : vector<8x96xf32> to vector<8x8xf32>
    %76 = arith.truncf %75 : vector<8x8xf32> to vector<8x8xbf16>
    %77 = vector.extract_strided_slice %8 {offsets = [0, 88], sizes = [8, 8], strides = [1, 1]} : vector<8x96xf32> to vector<8x8xf32>
    %78 = arith.truncf %77 : vector<8x8xf32> to vector<8x8xbf16>
    %cst_21 = arith.constant dense<0.000000e+00> : vector<8x8xf32>
    %79 = tpu.matmul %74, %76, %cst_21 {dimension_numbers = #tpu.dot_dimension_numbers<[1], [1], [0], [0], [0, 0, 1, 0], [], []>} : vector<8x8xbf16>, vector<8x8xbf16>, vector<8x8xf32> -> vector<8x8xf32>
    %80 = vector.broadcast %9 : vector<1x8xf32> to vector<8x8xf32>
    %81 = arith.addf %79, %80 : vector<8x8xf32>
    %cst_22 = arith.constant dense<0xFF800000> : vector<8xf32>
    %82 = vector.multi_reduction <maximumf>, %81, %cst_22 [1] : vector<8x8xf32> to vector<8xf32>
    %83 = vector.shape_cast %82 : vector<8xf32> to vector<8x1xf32>
    %84 = vector.broadcast %83 : vector<8x1xf32> to vector<8x8xf32>
    %85 = arith.subf %81, %84 : vector<8x8xf32>
    %86 = math.exp %85 : vector<8x8xf32>
    %cst_23 = arith.constant dense<0.000000e+00> : vector<8xf32>
    %87 = vector.multi_reduction <add>, %86, %cst_23 [1] : vector<8x8xf32> to vector<8xf32>
    %88 = vector.shape_cast %87 : vector<8xf32> to vector<8x1xf32>
    %89 = tpu.reciprocal %88 {approx = true} : vector<8x1xf32> -> vector<8x1xf32>
    %90 = vector.broadcast %89 : vector<8x1xf32> to vector<8x8xf32>
    %91 = arith.mulf %86, %90 : vector<8x8xf32>
    %92 = arith.truncf %91 : vector<8x8xf32> to vector<8x8xbf16>
    %cst_24 = arith.constant dense<0.000000e+00> : vector<8x8xf32>
    %93 = tpu.matmul %92, %78, %cst_24 {dimension_numbers = #tpu.dot_dimension_numbers<[1], [0], [0], [1], [0, 0, 1, 1], [], []>} : vector<8x8xbf16>, vector<8x8xbf16>, vector<8x8xf32> -> vector<8x8xf32>
    %94 = tpu.concatenate %30, %51, %72, %93 in 1 : vector<8x8xf32>, vector<8x8xf32>, vector<8x8xf32>, vector<8x8xf32> -> vector<8x32xf32>
    %95 = arith.truncf %94 : vector<8x32xf32> to vector<8x32xbf16>
    %c0_25 = arith.constant 0 : index
    %c0_26 = arith.constant 0 : index
    %96 = vector.load %arg5[%c0_25, %c0_26] : memref<32x32xbf16, #tpu.memory_space<vmem>>, vector<32x32xbf16>
    %cst_27 = arith.constant dense<0.000000e+00> : vector<8x32xf32>
    %97 = tpu.matmul %95, %96, %cst_27 {dimension_numbers = #tpu.dot_dimension_numbers<[1], [0], [0], [1], [0, 0, 1, 1], [], []>} : vector<8x32xbf16>, vector<32x32xbf16>, vector<8x32xf32> -> vector<8x32xf32>
    %c0_28 = arith.constant 0 : index
    %c0_29 = arith.constant 0 : index
    %98 = vector.load %arg6[%c0_28, %c0_29] : memref<1x32xf32, #tpu.memory_space<vmem>>, vector<1x32xf32>
    %99 = vector.broadcast %98 : vector<1x32xf32> to vector<8x32xf32>
    %100 = arith.addf %97, %99 : vector<8x32xf32>
    %101 = arith.addf %2, %100 : vector<8x32xf32>
    %c0_30 = arith.constant 0 : index
    %c0_31 = arith.constant 0 : index
    %102 = vector.load %arg7[%c0_30, %c0_31] : memref<1x32xf32, #tpu.memory_space<vmem>>, vector<1x32xf32>
    %c0_32 = arith.constant 0 : index
    %c0_33 = arith.constant 0 : index
    %103 = vector.load %arg8[%c0_32, %c0_33] : memref<1x32xf32, #tpu.memory_space<vmem>>, vector<1x32xf32>
    %cst_34 = arith.constant dense<0.000000e+00> : vector<8xf32>
    %104 = vector.multi_reduction <add>, %101, %cst_34 [1] : vector<8x32xf32> to vector<8xf32>
    %105 = vector.shape_cast %104 : vector<8xf32> to vector<8x1xf32>
    %cst_35 = arith.constant 3.200000e+01 : f32
    %106 = vector.broadcast %cst_35 : f32 to vector<8x1xf32>
    %107 = arith.divf %105, %106 : vector<8x1xf32>
    %108 = vector.broadcast %107 : vector<8x1xf32> to vector<8x32xf32>
    %109 = arith.subf %101, %108 : vector<8x32xf32>
    %110 = arith.mulf %109, %109 : vector<8x32xf32>
    %cst_36 = arith.constant dense<0.000000e+00> : vector<8xf32>
    %111 = vector.multi_reduction <add>, %110, %cst_36 [1] : vector<8x32xf32> to vector<8xf32>
    %112 = vector.shape_cast %111 : vector<8xf32> to vector<8x1xf32>
    %cst_37 = arith.constant 3.200000e+01 : f32
    %113 = vector.broadcast %cst_37 : f32 to vector<8x1xf32>
    %114 = arith.divf %112, %113 : vector<8x1xf32>
    %cst_38 = arith.constant 9.99999974E-6 : f32
    %115 = vector.broadcast %cst_38 : f32 to vector<8x1xf32>
    %116 = arith.addf %114, %115 : vector<8x1xf32>
    %117 = math.rsqrt %116 : vector<8x1xf32>
    %118 = vector.broadcast %117 : vector<8x1xf32> to vector<8x32xf32>
    %119 = arith.mulf %109, %118 : vector<8x32xf32>
    %120 = vector.broadcast %102 : vector<1x32xf32> to vector<8x32xf32>
    %121 = arith.mulf %119, %120 : vector<8x32xf32>
    %122 = vector.broadcast %103 : vector<1x32xf32> to vector<8x32xf32>
    %123 = arith.addf %121, %122 : vector<8x32xf32>
    %124 = arith.truncf %123 : vector<8x32xf32> to vector<8x32xbf16>
    %c0_39 = arith.constant 0 : index
    %c0_40 = arith.constant 0 : index
    %125 = vector.load %arg9[%c0_39, %c0_40] : memref<32x64xbf16, #tpu.memory_space<vmem>>, vector<32x64xbf16>
    %cst_41 = arith.constant dense<0.000000e+00> : vector<8x64xf32>
    %126 = tpu.matmul %124, %125, %cst_41 {dimension_numbers = #tpu.dot_dimension_numbers<[1], [0], [0], [1], [0, 0, 1, 1], [], []>} : vector<8x32xbf16>, vector<32x64xbf16>, vector<8x64xf32> -> vector<8x64xf32>
    %c0_42 = arith.constant 0 : index
    %c0_43 = arith.constant 0 : index
    %127 = vector.load %arg10[%c0_42, %c0_43] : memref<1x64xf32, #tpu.memory_space<vmem>>, vector<1x64xf32>
    %128 = vector.broadcast %127 : vector<1x64xf32> to vector<8x64xf32>
    %129 = arith.addf %126, %128 : vector<8x64xf32>
    %cst_44 = arith.constant 0.000000e+00 : f32
    %130 = vector.broadcast %cst_44 : f32 to vector<8x64xf32>
    %131 = arith.maximumf %129, %130 : vector<8x64xf32>
    %132 = arith.truncf %131 : vector<8x64xf32> to vector<8x64xbf16>
    %c0_45 = arith.constant 0 : index
    %c0_46 = arith.constant 0 : index
    %133 = vector.load %arg11[%c0_45, %c0_46] : memref<64x32xbf16, #tpu.memory_space<vmem>>, vector<64x32xbf16>
    %cst_47 = arith.constant dense<0.000000e+00> : vector<8x32xf32>
    %134 = tpu.matmul %132, %133, %cst_47 {dimension_numbers = #tpu.dot_dimension_numbers<[1], [0], [0], [1], [0, 0, 1, 1], [], []>} : vector<8x64xbf16>, vector<64x32xbf16>, vector<8x32xf32> -> vector<8x32xf32>
    %c0_48 = arith.constant 0 : index
    %c0_49 = arith.constant 0 : index
    %135 = vector.load %arg12[%c0_48, %c0_49] : memref<1x32xf32, #tpu.memory_space<vmem>>, vector<1x32xf32>
    %136 = vector.broadcast %135 : vector<1x32xf32> to vector<8x32xf32>
    %137 = arith.addf %134, %136 : vector<8x32xf32>
    %138 = arith.addf %123, %137 : vector<8x32xf32>
    %c0_50 = arith.constant 0 : index
    %c0_51 = arith.constant 0 : index
    %139 = vector.load %arg13[%c0_50, %c0_51] : memref<1x32xf32, #tpu.memory_space<vmem>>, vector<1x32xf32>
    %c0_52 = arith.constant 0 : index
    %c0_53 = arith.constant 0 : index
    %140 = vector.load %arg14[%c0_52, %c0_53] : memref<1x32xf32, #tpu.memory_space<vmem>>, vector<1x32xf32>
    %cst_54 = arith.constant dense<0.000000e+00> : vector<8xf32>
    %141 = vector.multi_reduction <add>, %138, %cst_54 [1] : vector<8x32xf32> to vector<8xf32>
    %142 = vector.shape_cast %141 : vector<8xf32> to vector<8x1xf32>
    %cst_55 = arith.constant 3.200000e+01 : f32
    %143 = vector.broadcast %cst_55 : f32 to vector<8x1xf32>
    %144 = arith.divf %142, %143 : vector<8x1xf32>
    %145 = vector.broadcast %144 : vector<8x1xf32> to vector<8x32xf32>
    %146 = arith.subf %138, %145 : vector<8x32xf32>
    %147 = arith.mulf %146, %146 : vector<8x32xf32>
    %cst_56 = arith.constant dense<0.000000e+00> : vector<8xf32>
    %148 = vector.multi_reduction <add>, %147, %cst_56 [1] : vector<8x32xf32> to vector<8xf32>
    %149 = vector.shape_cast %148 : vector<8xf32> to vector<8x1xf32>
    %cst_57 = arith.constant 3.200000e+01 : f32
    %150 = vector.broadcast %cst_57 : f32 to vector<8x1xf32>
    %151 = arith.divf %149, %150 : vector<8x1xf32>
    %cst_58 = arith.constant 9.99999974E-6 : f32
    %152 = vector.broadcast %cst_58 : f32 to vector<8x1xf32>
    %153 = arith.addf %151, %152 : vector<8x1xf32>
    %154 = math.rsqrt %153 : vector<8x1xf32>
    %155 = vector.broadcast %154 : vector<8x1xf32> to vector<8x32xf32>
    %156 = arith.mulf %146, %155 : vector<8x32xf32>
    %157 = vector.broadcast %139 : vector<1x32xf32> to vector<8x32xf32>
    %158 = arith.mulf %156, %157 : vector<8x32xf32>
    %159 = vector.broadcast %140 : vector<1x32xf32> to vector<8x32xf32>
    %160 = arith.addf %158, %159 : vector<8x32xf32>
    %161 = vector.shape_cast %160 : vector<8x32xf32> to vector<1x8x32xf32>
    %c0_59 = arith.constant 0 : index
    %c0_60 = arith.constant 0 : index
    %c0_61 = arith.constant 0 : index
    %162 = vector.load %arg15[%c0_59, %c0_60, %c0_61] : memref<1x8x32xf32, #tpu.memory_space<vmem>>, vector<1x8x32xf32>
    tpu.vector_store %arg15[%c0_59, %c0_60, %c0_61], %161 {strides = array<i32>} : memref<1x8x32xf32, #tpu.memory_space<vmem>>, vector<1x8x32xf32>,
    return
  }
  func.func @transform_0(%arg0: i32) -> (i32, i32, i32) {
    %c0_i32 = arith.constant 0 : i32
    %c0_i32_0 = arith.constant 0 : i32
    %c0_i32_1 = arith.constant 0 : i32
    return %arg0, %c0_i32, %c0_i32_0 : i32, i32, i32
  }
  func.func @transform_1(%arg0: i32) -> (i32, i32, i32) {
    %c0_i32 = arith.constant 0 : i32
    %c0_i32_0 = arith.constant 0 : i32
    %c0_i32_1 = arith.constant 0 : i32
    return %arg0, %c0_i32, %c0_i32_0 : i32, i32, i32
  }
  func.func @transform_2(%arg0: i32) -> (i32, i32) {
    %c0_i32 = arith.constant 0 : i32
    %c0_i32_0 = arith.constant 0 : i32
    %c0_i32_1 = arith.constant 0 : i32
    return %c0_i32, %c0_i32_0 : i32, i32
  }
  func.func @transform_3(%arg0: i32) -> (i32, i32) {
    %c0_i32 = arith.constant 0 : i32
    %c0_i32_0 = arith.constant 0 : i32
    %c0_i32_1 = arith.constant 0 : i32
    return %c0_i32, %c0_i32_0 : i32, i32
  }
  func.func @transform_4(%arg0: i32) -> (i32, i32) {
    %c0_i32 = arith.constant 0 : i32
    %c0_i32_0 = arith.constant 0 : i32
    %c0_i32_1 = arith.constant 0 : i32
    return %c0_i32, %c0_i32_0 : i32, i32
  }
  func.func @transform_5(%arg0: i32) -> (i32, i32) {
    %c0_i32 = arith.constant 0 : i32
    %c0_i32_0 = arith.constant 0 : i32
    %c0_i32_1 = arith.constant 0 : i32
    return %c0_i32, %c0_i32_0 : i32, i32
  }
  func.func @transform_6(%arg0: i32) -> (i32, i32) {
    %c0_i32 = arith.constant 0 : i32
    %c0_i32_0 = arith.constant 0 : i32
    %c0_i32_1 = arith.constant 0 : i32
    return %c0_i32, %c0_i32_0 : i32, i32
  }
  func.func @transform_7(%arg0: i32) -> (i32, i32) {
    %c0_i32 = arith.constant 0 : i32
    %c0_i32_0 = arith.constant 0 : i32
    %c0_i32_1 = arith.constant 0 : i32
    return %c0_i32, %c0_i32_0 : i32, i32
  }
  func.func @transform_8(%arg0: i32) -> (i32, i32) {
    %c0_i32 = arith.constant 0 : i32
    %c0_i32_0 = arith.constant 0 : i32
    %c0_i32_1 = arith.constant 0 : i32
    return %c0_i32, %c0_i32_0 : i32, i32
  }
  func.func @transform_9(%arg0: i32) -> (i32, i32) {
    %c0_i32 = arith.constant 0 : i32
    %c0_i32_0 = arith.constant 0 : i32
    %c0_i32_1 = arith.constant 0 : i32
    return %c0_i32, %c0_i32_0 : i32, i32
  }
  func.func @transform_10(%arg0: i32) -> (i32, i32) {
    %c0_i32 = arith.constant 0 : i32
    %c0_i32_0 = arith.constant 0 : i32
    %c0_i32_1 = arith.constant 0 : i32
    return %c0_i32, %c0_i32_0 : i32, i32
  }
  func.func @transform_11(%arg0: i32) -> (i32, i32) {
    %c0_i32 = arith.constant 0 : i32
    %c0_i32_0 = arith.constant 0 : i32
    %c0_i32_1 = arith.constant 0 : i32
    return %c0_i32, %c0_i32_0 : i32, i32
  }
  func.func @transform_12(%arg0: i32) -> (i32, i32) {
    %c0_i32 = arith.constant 0 : i32
    %c0_i32_0 = arith.constant 0 : i32
    %c0_i32_1 = arith.constant 0 : i32
    return %c0_i32, %c0_i32_0 : i32, i32
  }
  func.func @transform_13(%arg0: i32) -> (i32, i32) {
    %c0_i32 = arith.constant 0 : i32
    %c0_i32_0 = arith.constant 0 : i32
    %c0_i32_1 = arith.constant 0 : i32
    return %c0_i32, %c0_i32_0 : i32, i32
  }
  func.func @transform_14(%arg0: i32) -> (i32, i32, i32) {
    %c0_i32 = arith.constant 0 : i32
    %c0_i32_0 = arith.constant 0 : i32
    %c0_i32_1 = arith.constant 0 : i32
    return %arg0, %c0_i32, %c0_i32_0 : i32, i32, i32
  }
}

</mosaic_0001>

<llo_original>
// kernel: tpu_custom_call.1
$region0: #{tpu_custom_call.1}
  #allocation0 [shape = 'u32[]', space=smem, size = 0x4, offset = 0x4, fixed_abs, tag = 'smem constant byte address 0x4 - core index']
  #allocation1 [shape = 'u32[72,128]{1,0:T(1,128)}', space=vmem, size = 0x9000, scoped, tag = 'internal scratch']
  %s0 = inlined_call_operand.vmem [shape: f32[2,8,32], index: 0, kind: input, shape index: {}]
  %s1 = inlined_call_operand.hbm [shape: f32[2,1,8], index: 1, kind: input, shape index: {}]
  %s2 = inlined_call_operand.vmem [shape: bf16[32,96], index: 2, kind: input, shape index: {}]
  %s3 = inlined_call_operand.vmem [shape: f32[1,96], index: 3, kind: input, shape index: {}]
  %s4 = inlined_call_operand.vmem [shape: bf16[32,32], index: 4, kind: input, shape index: {}]
  %s5 = inlined_call_operand.vmem [shape: f32[1,32], index: 5, kind: input, shape index: {}]
  %s6 = inlined_call_operand.vmem [shape: f32[1,32], index: 6, kind: input, shape index: {}]
  %s7 = inlined_call_operand.vmem [shape: f32[1,32], index: 7, kind: input, shape index: {}]
  %s8 = inlined_call_operand.hbm [shape: bf16[32,64], index: 8, kind: input, shape index: {}]
  %s9 = inlined_call_operand.vmem [shape: f32[1,64], index: 9, kind: input, shape index: {}]
  %s10 = inlined_call_operand.vmem [shape: bf16[64,32], index: 10, kind: input, shape index: {}]
  %s11 = inlined_call_operand.vmem [shape: f32[1,32], index: 11, kind: input, shape index: {}]
  %s12 = inlined_call_operand.vmem [shape: f32[1,32], index: 12, kind: input, shape index: {}]
  %s13 = inlined_call_operand.vmem [shape: f32[1,32], index: 13, kind: input, shape index: {}]
  %s14 = inlined_call_operand.hbm [shape: f32[2,8,32], index: 14, kind: output, shape index: {}]
  %s15 = sld [smem:[#allocation0]]
  $region97: #{tpu_custom_call.1} parent=0
    _
  %s17 = ssub.s32 1, %s15
  %s18 = scalar_select 0, %s17, %s15
  $region1: #{tpu_custom_call.1} parent=0
    #allocation2 [shape = 'u8[1024]{0}', space=vmem, size = 0x400, scoped, tag = 'input window, operand 1']
    #allocation3 [shape = 's32[2]{0}', space=sflag, size = 0x8, scoped, tag = 'scoped memory for tpu_custom_call.1']
    #allocation4 [shape = 's32[2]{0}', space=sflag, size = 0x8, scoped, tag = 'scoped memory for tpu_custom_call.1']
    #allocation5 [shape = 'u8[8192]{0}', space=vmem, size = 0x2000, scoped, tag = 'input window, operand 8, single buffered']
    #allocation6 [shape = 's32[1]{0}', space=sflag, size = 0x4, scoped, tag = 'scoped memory for tpu_custom_call.1']
    #allocation7 [shape = 'u8[8192]{0}', space=vmem, size = 0x2000, scoped, tag = 'output window, operand 0']
    %19 = vsyncpa [#allocation3], 0
    %s20 = scalar_lea.sflag [#allocation3], 1
    %21 = vsyncpa %s20, 0
    %22 = vsyncpa [#allocation6], 0
    %23 = vsyncpa [#allocation4], 0
    %s24 = scalar_lea.sflag [#allocation4], 1
    %25 = vsyncpa %s24, 0
    loop: start=0, step=1, limit=4
    $region2: #{tpu_custom_call.1} parent=1 // loop_pre_header
      _
    $region3: #{tpu_custom_call.1} parent=1 // loop_header
      %s27 = sphi 0, %s31
      %p28 = scmp.ge.s32.totalorder %s27, 4
      %s37 = sphi 0, %s39
      %s40 = sphi 0, %s37
      %s41 = sphi 0, %s40
      %s57 = sphi 0, %s41
      %s63 = sphi 0, %s65
      %s66 = sphi 0, %s63
      %s67 = sphi 0, %s66
      %s83 = sphi 0, %s67
      %s87 = sphi 0, %s87
      %s89 = sphi 0, %s87
      %s90 = sphi 0, %s89
      %s104 = sphi 0, %s90
      %s108 = sphi 0, %s108
      %s110 = sphi 0, %s108
      %s111 = sphi 0, %s110
      %s125 = sphi 0, %s111
      %s129 = sphi 0, %s129
      %s131 = sphi 0, %s129
      %s132 = sphi 0, %s131
      %s146 = sphi 0, %s132
      %s150 = sphi 0, %s150
      %s152 = sphi 0, %s150
      %s153 = sphi 0, %s152
      %s167 = sphi 0, %s153
      %s171 = sphi 0, %s171
      %s173 = sphi 0, %s171
      %s174 = sphi 0, %s173
      %s188 = sphi 0, %s174
      %s192 = sphi 0, %s192
      %s194 = sphi 0, %s192
      %s195 = sphi 0, %s194
      %s209 = sphi 0, %s195
      %s213 = sphi 0, %s213
      %s215 = sphi 0, %s213
      %s216 = sphi 0, %s215
      %s230 = sphi 0, %s216
      %s234 = sphi 0, %s234
      %s236 = sphi 0, %s234
      %s237 = sphi 0, %s236
      %s251 = sphi 0, %s237
      %s255 = sphi 0, %s255
      %s257 = sphi 0, %s255
      %s258 = sphi 0, %s257
      %s272 = sphi 0, %s258
      %s276 = sphi 0, %s276
      %s278 = sphi 0, %s276
      %s279 = sphi 0, %s278
      %s293 = sphi 0, %s279
      %s297 = sphi 0, %s297
      %s299 = sphi 0, %s297
      %s300 = sphi 0, %s299
      %s314 = sphi 0, %s300
      %s318 = sphi 0, %s318
      %s320 = sphi 0, %s318
      %s321 = sphi 0, %s320
      %s335 = sphi 0, %s321
      %s341 = sphi 0, %s343
      %s344 = sphi 0, %s341
      %s345 = sphi 0, %s344
      %s361 = sphi 0, %s345
    $region4: #{tpu_custom_call.1} parent=1 // loop_header_branch
      %30 = sbr.rel (%p28) target = $region8
    $region5: #{tpu_custom_call.1} parent=1 // loop_body
      %s32 = ssub.s32 %s27, 1
      %s33 = ssub.s32 %s27, 2
      %s34 = sadd.s32 %s27, 1
      %s35 = ssub.s32 %s27, %s34
      %p36 = scmp.eq.s32.totalorder %s35, 0
      %s38 = sadd.s32 %s37, 1
      %s39 = scalar_select %p36, %s37, %s38
      %p42 = pneg %p36
      %p43 = scmp.eq.s32.totalorder %s27, 1
      %p44 = por %p42, %p43
      %p45 = scmp.ne.s32.totalorder %s37, %s40
      %p46 = scmp.eq.s32.totalorder %s27, 0
      %p47 = por %p45, %p46
      %p48 = scmp.ne.s32.totalorder %s37, %s40
      %p49 = scmp.eq.s32.totalorder %s32, 1
      %p50 = por %p48, %p49
      %p51 = scmp.ne.s32.totalorder %s40, %s41
      %p52 = scmp.eq.s32.totalorder %s32, 0
      %p53 = por %p51, %p52
      %p54 = scmp.ne.s32.totalorder %s40, %s41
      %p55 = scmp.eq.s32.totalorder %s33, 1
      %p56 = por %p54, %p55
      %p58 = scmp.ne.s32.totalorder %s41, %s57
      %p59 = scmp.eq.s32.totalorder %s33, 0
      %p60 = por %p58, %p59
      %s61 = ssub.s32 %s27, %s34
      %p62 = scmp.eq.s32.totalorder %s61, 0
      %s64 = sadd.s32 %s63, 1
      %s65 = scalar_select %p62, %s63, %s64
      %p68 = pneg %p62
      %p69 = scmp.eq.s32.totalorder %s27, 1
      %p70 = por %p68, %p69
      %p71 = scmp.ne.s32.totalorder %s63, %s66
      %p72 = scmp.eq.s32.totalorder %s27, 0
      %p73 = por %p71, %p72
      %p74 = scmp.ne.s32.totalorder %s63, %s66
      %p75 = scmp.eq.s32.totalorder %s32, 1
      %p76 = por %p74, %p75
      %p77 = scmp.ne.s32.totalorder %s66, %s67
      %p78 = scmp.eq.s32.totalorder %s32, 0
      %p79 = por %p77, %p78
      %p80 = scmp.ne.s32.totalorder %s66, %s67
      %p81 = scmp.eq.s32.totalorder %s33, 1
      %p82 = por %p80, %p81
      %p84 = scmp.ne.s32.totalorder %s67, %s83
      %p85 = scmp.eq.s32.totalorder %s33, 0
      %p86 = por %p84, %p85
      %s88 = sadd.s32 %s87, 1
      %p91 = scmp.eq.s32.totalorder %s27, 1
      %p92 = scmp.ne.s32.totalorder %s87, %s89
      %p93 = scmp.eq.s32.totalorder %s27, 0
      %p94 = por %p92, %p93
      %p95 = scmp.ne.s32.totalorder %s87, %s89
      %p96 = scmp.eq.s32.totalorder %s32, 1
      %p97 = por %p95, %p96
      %p98 = scmp.ne.s32.totalorder %s89, %s90
      %p99 = scmp.eq.s32.totalorder %s32, 0
      %p100 = por %p98, %p99
      %p101 = scmp.ne.s32.totalorder %s89, %s90
      %p102 = scmp.eq.s32.totalorder %s33, 1
      %p103 = por %p101, %p102
      %p105 = scmp.ne.s32.totalorder %s90, %s104
      %p106 = scmp.eq.s32.totalorder %s33, 0
      %p107 = por %p105, %p106
      %s109 = sadd.s32 %s108, 1
      %p112 = scmp.eq.s32.totalorder %s27, 1
      %p113 = scmp.ne.s32.totalorder %s108, %s110
      %p114 = scmp.eq.s32.totalorder %s27, 0
      %p115 = por %p113, %p114
      %p116 = scmp.ne.s32.totalorder %s108, %s110
      %p117 = scmp.eq.s32.totalorder %s32, 1
      %p118 = por %p116, %p117
      %p119 = scmp.ne.s32.totalorder %s110, %s111
      %p120 = scmp.eq.s32.totalorder %s32, 0
      %p121 = por %p119, %p120
      %p122 = scmp.ne.s32.totalorder %s110, %s111
      %p123 = scmp.eq.s32.totalorder %s33, 1
      %p124 = por %p122, %p123
      %p126 = scmp.ne.s32.totalorder %s111, %s125
      %p127 = scmp.eq.s32.totalorder %s33, 0
      %p128 = por %p126, %p127
      %s130 = sadd.s32 %s129, 1
      %p133 = scmp.eq.s32.totalorder %s27, 1
      %p134 = scmp.ne.s32.totalorder %s129, %s131
      %p135 = scmp.eq.s32.totalorder %s27, 0
      %p136 = por %p134, %p135
      %p137 = scmp.ne.s32.totalorder %s129, %s131
      %p138 = scmp.eq.s32.totalorder %s32, 1
      %p139 = por %p137, %p138
      %p140 = scmp.ne.s32.totalorder %s131, %s132
      %p141 = scmp.eq.s32.totalorder %s32, 0
      %p142 = por %p140, %p141
      %p143 = scmp.ne.s32.totalorder %s131, %s132
      %p144 = scmp.eq.s32.totalorder %s33, 1
      %p145 = por %p143, %p144
      %p147 = scmp.ne.s32.totalorder %s132, %s146
      %p148 = scmp.eq.s32.totalorder %s33, 0
      %p149 = por %p147, %p148
      %s151 = sadd.s32 %s150, 1
      %p154 = scmp.eq.s32.totalorder %s27, 1
      %p155 = scmp.ne.s32.totalorder %s150, %s152
      %p156 = scmp.eq.s32.totalorder %s27, 0
      %p157 = por %p155, %p156
      %p158 = scmp.ne.s32.totalorder %s150, %s152
      %p159 = scmp.eq.s32.totalorder %s32, 1
      %p160 = por %p158, %p159
      %p161 = scmp.ne.s32.totalorder %s152, %s153
      %p162 = scmp.eq.s32.totalorder %s32, 0
      %p163 = por %p161, %p162
      %p164 = scmp.ne.s32.totalorder %s152, %s153
      %p165 = scmp.eq.s32.totalorder %s33, 1
      %p166 = por %p164, %p165
      %p168 = scmp.ne.s32.totalorder %s153, %s167
      %p169 = scmp.eq.s32.totalorder %s33, 0
      %p170 = por %p168, %p169
      %s172 = sadd.s32 %s171, 1
      %p175 = scmp.eq.s32.totalorder %s27, 1
      %p176 = scmp.ne.s32.totalorder %s171, %s173
      %p177 = scmp.eq.s32.totalorder %s27, 0
      %p178 = por %p176, %p177
      %p179 = scmp.ne.s32.totalorder %s171, %s173
      %p180 = scmp.eq.s32.totalorder %s32, 1
      %p181 = por %p179, %p180
      %p182 = scmp.ne.s32.totalorder %s173, %s174
      %p183 = scmp.eq.s32.totalorder %s32, 0
      %p184 = por %p182, %p183
      %p185 = scmp.ne.s32.totalorder %s173, %s174
      %p186 = scmp.eq.s32.totalorder %s33, 1
      %p187 = por %p185, %p186
      %p189 = scmp.ne.s32.totalorder %s174, %s188
      %p190 = scmp.eq.s32.totalorder %s33, 0
      %p191 = por %p189, %p190
      %s193 = sadd.s32 %s192, 1
      %p196 = scmp.eq.s32.totalorder %s27, 1
      %p197 = scmp.ne.s32.totalorder %s192, %s194
      %p198 = scmp.eq.s32.totalorder %s27, 0
      %p199 = por %p197, %p198
      %p200 = scmp.ne.s32.totalorder %s192, %s194
      %p201 = scmp.eq.s32.totalorder %s32, 1
      %p202 = por %p200, %p201
      %p203 = scmp.ne.s32.totalorder %s194, %s195
      %p204 = scmp.eq.s32.totalorder %s32, 0
      %p205 = por %p203, %p204
      %p206 = scmp.ne.s32.totalorder %s194, %s195
      %p207 = scmp.eq.s32.totalorder %s33, 1
      %p208 = por %p206, %p207
      %p210 = scmp.ne.s32.totalorder %s195, %s209
      %p211 = scmp.eq.s32.totalorder %s33, 0
      %p212 = por %p210, %p211
      %s214 = sadd.s32 %s213, 1
      %p217 = scmp.eq.s32.totalorder %s27, 1
      %p218 = scmp.ne.s32.totalorder %s213, %s215
      %p219 = scmp.eq.s32.totalorder %s27, 0
      %p220 = por %p218, %p219
      %p221 = scmp.ne.s32.totalorder %s213, %s215
      %p222 = scmp.eq.s32.totalorder %s32, 1
      %p223 = por %p221, %p222
      %p224 = scmp.ne.s32.totalorder %s215, %s216
      %p225 = scmp.eq.s32.totalorder %s32, 0
      %p226 = por %p224, %p225
      %p227 = scmp.ne.s32.totalorder %s215, %s216
      %p228 = scmp.eq.s32.totalorder %s33, 1
      %p229 = por %p227, %p228
      %p231 = scmp.ne.s32.totalorder %s216, %s230
      %p232 = scmp.eq.s32.totalorder %s33, 0
      %p233 = por %p231, %p232
      %s235 = sadd.s32 %s234, 1
      %p238 = scmp.eq.s32.totalorder %s27, 1
      %p239 = scmp.ne.s32.totalorder %s234, %s236
      %p240 = scmp.eq.s32.totalorder %s27, 0
      %p241 = por %p239, %p240
      %p242 = scmp.ne.s32.totalorder %s234, %s236
      %p243 = scmp.eq.s32.totalorder %s32, 1
      %p244 = por %p242, %p243
      %p245 = scmp.ne.s32.totalorder %s236, %s237
      %p246 = scmp.eq.s32.totalorder %s32, 0
      %p247 = por %p245, %p246
      %p248 = scmp.ne.s32.totalorder %s236, %s237
      %p249 = scmp.eq.s32.totalorder %s33, 1
      %p250 = por %p248, %p249
      %p252 = scmp.ne.s32.totalorder %s237, %s251
      %p253 = scmp.eq.s32.totalorder %s33, 0
      %p254 = por %p252, %p253
      %s256 = sadd.s32 %s255, 1
      %p259 = scmp.eq.s32.totalorder %s27, 1
      %p260 = scmp.ne.s32.totalorder %s255, %s257
      %p261 = scmp.eq.s32.totalorder %s27, 0
      %p262 = por %p260, %p261
      %p263 = scmp.ne.s32.totalorder %s255, %s257
      %p264 = scmp.eq.s32.totalorder %s32, 1
      %p265 = por %p263, %p264
      %p266 = scmp.ne.s32.totalorder %s257, %s258
      %p267 = scmp.eq.s32.totalorder %s32, 0
      %p268 = por %p266, %p267
      %p269 = scmp.ne.s32.totalorder %s257, %s258
      %p270 = scmp.eq.s32.totalorder %s33, 1
      %p271 = por %p269, %p270
      %p273 = scmp.ne.s32.totalorder %s258, %s272
      %p274 = scmp.eq.s32.totalorder %s33, 0
      %p275 = por %p273, %p274
      %s277 = sadd.s32 %s276, 1
      %p280 = scmp.eq.s32.totalorder %s27, 1
      %p281 = scmp.ne.s32.totalorder %s276, %s278
      %p282 = scmp.eq.s32.totalorder %s27, 0
      %p283 = por %p281, %p282
      %p284 = scmp.ne.s32.totalorder %s276, %s278
      %p285 = scmp.eq.s32.totalorder %s32, 1
      %p286 = por %p284, %p285
      %p287 = scmp.ne.s32.totalorder %s278, %s279
      %p288 = scmp.eq.s32.totalorder %s32, 0
      %p289 = por %p287, %p288
      %p290 = scmp.ne.s32.totalorder %s278, %s279
      %p291 = scmp.eq.s32.totalorder %s33, 1
      %p292 = por %p290, %p291
      %p294 = scmp.ne.s32.totalorder %s279, %s293
      %p295 = scmp.eq.s32.totalorder %s33, 0
      %p296 = por %p294, %p295
      %s298 = sadd.s32 %s297, 1
      %p301 = scmp.eq.s32.totalorder %s27, 1
      %p302 = scmp.ne.s32.totalorder %s297, %s299
      %p303 = scmp.eq.s32.totalorder %s27, 0
      %p304 = por %p302, %p303
      %p305 = scmp.ne.s32.totalorder %s297, %s299
      %p306 = scmp.eq.s32.totalorder %s32, 1
      %p307 = por %p305, %p306
      %p308 = scmp.ne.s32.totalorder %s299, %s300
      %p309 = scmp.eq.s32.totalorder %s32, 0
      %p310 = por %p308, %p309
      %p311 = scmp.ne.s32.totalorder %s299, %s300
      %p312 = scmp.eq.s32.totalorder %s33, 1
      %p313 = por %p311, %p312
      %p315 = scmp.ne.s32.totalorder %s300, %s314
      %p316 = scmp.eq.s32.totalorder %s33, 0
      %p317 = por %p315, %p316
      %s319 = sadd.s32 %s318, 1
      %p322 = scmp.eq.s32.totalorder %s27, 1
      %p323 = scmp.ne.s32.totalorder %s318, %s320
      %p324 = scmp.eq.s32.totalorder %s27, 0
      %p325 = por %p323, %p324
      %p326 = scmp.ne.s32.totalorder %s318, %s320
      %p327 = scmp.eq.s32.totalorder %s32, 1
      %p328 = por %p326, %p327
      %p329 = scmp.ne.s32.totalorder %s320, %s321
      %p330 = scmp.eq.s32.totalorder %s32, 0
      %p331 = por %p329, %p330
      %p332 = scmp.ne.s32.totalorder %s320, %s321
      %p333 = scmp.eq.s32.totalorder %s33, 1
      %p334 = por %p332, %p333
      %p336 = scmp.ne.s32.totalorder %s321, %s335
      %p337 = scmp.eq.s32.totalorder %s33, 0
      %p338 = por %p336, %p337
      %s339 = ssub.s32 %s27, %s34
      %p340 = scmp.eq.s32.totalorder %s339, 0
      %s342 = sadd.s32 %s341, 1
      %s343 = scalar_select %p340, %s341, %s342
      %p346 = pneg %p340
      %p347 = scmp.eq.s32.totalorder %s27, 1
      %p348 = por %p346, %p347
      %p349 = scmp.ne.s32.totalorder %s341, %s344
      %p350 = scmp.eq.s32.totalorder %s27, 0
      %p351 = por %p349, %p350
      %p352 = scmp.ne.s32.totalorder %s341, %s344
      %p353 = scmp.eq.s32.totalorder %s32, 1
      %p354 = por %p352, %p353
      %p355 = scmp.ne.s32.totalorder %s344, %s345
      %p356 = scmp.eq.s32.totalorder %s32, 0
      %p357 = por %p355, %p356
      %p358 = scmp.ne.s32.totalorder %s344, %s345
      %p359 = scmp.eq.s32.totalorder %s33, 1
      %p360 = por %p358, %p359
      %p362 = scmp.ne.s32.totalorder %s345, %s361
      %p363 = scmp.eq.s32.totalorder %s33, 0
      %p364 = por %p362, %p363
      %p365 = scmp.le.s32.totalorder 1, %s27
      %p366 = scmp.lt.s32.totalorder %s27, 3
      %p367 = pnand %p365, %p366
      %p368 = pneg %p367
      // Predicated region
      $region9: #{tpu_custom_call.1} parent=5 // pred_check
        _
      $region10: #{tpu_custom_call.1} parent=5 // pred_check_branch
        %370 = sbr.rel (%p367) target = $region12
      $region11: #{tpu_custom_call.1} parent=5 // pred_region
        %s371 = ssub.s32 %s27, 1
        // Predicated region
        $region13: #{tpu_custom_call.1} parent=11 // pred_check
          %p372 = pneg %p100
        $region14: #{tpu_custom_call.1} parent=11 // pred_check_branch
          %374 = sbr.rel (%p372) target = $region16
        $region15: #{tpu_custom_call.1} parent=11 // pred_region
          _
        $region16: #{tpu_custom_call.1} parent=11 // pred_fallthru
          _
        // Predicated region
        $region17: #{tpu_custom_call.1} parent=11 // pred_check
          %p375 = pneg %p121
        $region18: #{tpu_custom_call.1} parent=11 // pred_check_branch
          %377 = sbr.rel (%p375) target = $region20
        $region19: #{tpu_custom_call.1} parent=11 // pred_region
          _
        $region20: #{tpu_custom_call.1} parent=11 // pred_fallthru
          _
        // Predicated region
        $region21: #{tpu_custom_call.1} parent=11 // pred_check
          %p378 = pneg %p142
        $region22: #{tpu_custom_call.1} parent=11 // pred_check_branch
          %380 = sbr.rel (%p378) target = $region24
        $region23: #{tpu_custom_call.1} parent=11 // pred_region
          _
        $region24: #{tpu_custom_call.1} parent=11 // pred_fallthru
          _
        // Predicated region
        $region25: #{tpu_custom_call.1} parent=11 // pred_check
          %p381 = pneg %p163
        $region26: #{tpu_custom_call.1} parent=11 // pred_check_branch
          %383 = sbr.rel (%p381) target = $region28
        $region27: #{tpu_custom_call.1} parent=11 // pred_region
          _
        $region28: #{tpu_custom_call.1} parent=11 // pred_fallthru
          _
        // Predicated region
        $region29: #{tpu_custom_call.1} parent=11 // pred_check
          %p384 = pneg %p184
        $region30: #{tpu_custom_call.1} parent=11 // pred_check_branch
          %386 = sbr.rel (%p384) target = $region32
        $region31: #{tpu_custom_call.1} parent=11 // pred_region
          _
        $region32: #{tpu_custom_call.1} parent=11 // pred_fallthru
          _
        // Predicated region
        $region33: #{tpu_custom_call.1} parent=11 // pred_check
          %p387 = pneg %p205
        $region34: #{tpu_custom_call.1} parent=11 // pred_check_branch
          %389 = sbr.rel (%p387) target = $region36
        $region35: #{tpu_custom_call.1} parent=11 // pred_region
          _
        $region36: #{tpu_custom_call.1} parent=11 // pred_fallthru
          _
        // Predicated region
        $region37: #{tpu_custom_call.1} parent=11 // pred_check
          %p390 = pneg %p226
        $region38: #{tpu_custom_call.1} parent=11 // pred_check_branch
          %392 = sbr.rel (%p390) target = $region40
        $region39: #{tpu_custom_call.1} parent=11 // pred_region
          %394 = vsyncadd [#allocation6], 0
          %s395 = sshll.u32 %s8, 4
          %s396 = int_to_ptr.hbm [resolvable:$true] %s395
          %s397 = sshll.u32 [#allocation5], 4
          %s398 = int_to_ptr.vmem [resolvable:$true] %s397
          %403 = dma.hbm_to_vmem [thread:$0]  %s396, 256, %s398, [#allocation6], 64, 64, 4
        $region40: #{tpu_custom_call.1} parent=11 // pred_fallthru
          _
        // Predicated region
        $region41: #{tpu_custom_call.1} parent=11 // pred_check
          %p404 = pneg %p247
        $region42: #{tpu_custom_call.1} parent=11 // pred_check_branch
          %406 = sbr.rel (%p404) target = $region44
        $region43: #{tpu_custom_call.1} parent=11 // pred_region
          _
        $region44: #{tpu_custom_call.1} parent=11 // pred_fallthru
          _
        // Predicated region
        $region45: #{tpu_custom_call.1} parent=11 // pred_check
          %p407 = pneg %p268
        $region46: #{tpu_custom_call.1} parent=11 // pred_check_branch
          %409 = sbr.rel (%p407) target = $region48
        $region47: #{tpu_custom_call.1} parent=11 // pred_region
          _
        $region48: #{tpu_custom_call.1} parent=11 // pred_fallthru
          _
        // Predicated region
        $region49: #{tpu_custom_call.1} parent=11 // pred_check
          %p410 = pneg %p289
        $region50: #{tpu_custom_call.1} parent=11 // pred_check_branch
          %412 = sbr.rel (%p410) target = $region52
        $region51: #{tpu_custom_call.1} parent=11 // pred_region
          _
        $region52: #{tpu_custom_call.1} parent=11 // pred_fallthru
          _
        // Predicated region
        $region53: #{tpu_custom_call.1} parent=11 // pred_check
          %p413 = pneg %p310
        $region54: #{tpu_custom_call.1} parent=11 // pred_check_branch
          %415 = sbr.rel (%p413) target = $region56
        $region55: #{tpu_custom_call.1} parent=11 // pred_region
          _
        $region56: #{tpu_custom_call.1} parent=11 // pred_fallthru
          _
        // Predicated region
        $region57: #{tpu_custom_call.1} parent=11 // pred_check
          %p416 = pneg %p331
        $region58: #{tpu_custom_call.1} parent=11 // pred_check_branch
          %418 = sbr.rel (%p416) target = $region60
        $region59: #{tpu_custom_call.1} parent=11 // pred_region
          _
        $region60: #{tpu_custom_call.1} parent=11 // pred_fallthru
          _
      $region12: #{tpu_custom_call.1} parent=5 // pred_fallthru
        _
      %p419 = scmp.lt.s32.totalorder %s27, 2
      // Predicated region
      $region61: #{tpu_custom_call.1} parent=5 // pred_check
        %p420 = pneg %p419
      $region62: #{tpu_custom_call.1} parent=5 // pred_check_branch
        %422 = sbr.rel (%p420) target = $region64
      $region63: #{tpu_custom_call.1} parent=5 // pred_region
        // Predicated region
        $region65: #{tpu_custom_call.1} parent=63 // pred_check
          %p423 = pneg %p47
        $region66: #{tpu_custom_call.1} parent=63 // pred_check_branch
          %425 = sbr.rel (%p423) target = $region68
        $region67: #{tpu_custom_call.1} parent=63 // pred_region
          %p426 = scmp.lt.s32.totalorder %s27, 1
          %s427 = scalar_select %p426, %s27, 1
          %s428 = smul.addr %s427, 8
          %s429 = scalar_lea.vmem %s0, %s428
        $region68: #{tpu_custom_call.1} parent=63 // pred_fallthru
          _
        // Predicated region
        $region69: #{tpu_custom_call.1} parent=63 // pred_check
          %p430 = pneg %p73
        $region70: #{tpu_custom_call.1} parent=63 // pred_check_branch
          %432 = sbr.rel (%p430) target = $region72
        $region71: #{tpu_custom_call.1} parent=63 // pred_region
          %s433 = sand.u32 %s63, 1
          %s434 = scalar_lea.sflag [#allocation3], %s433
          %s435 = sand.u32 %s63, 1
          %s436 = scalar_lea.vmem [#allocation2], %s435
          %438 = vsyncadd %s434, 0
          %s439 = scalar_lea.hbm %s1, %s27
          %s441 = sshll.u32 %s439, 4
          %s442 = int_to_ptr.hbm [resolvable:$true] %s441
          %s443 = sshll.u32 %s436, 4
          %s444 = int_to_ptr.vmem [resolvable:$true] %s443
          %446 = dma.hbm_to_vmem [thread:$0]  %s442, 16, %s444, %s434
        $region72: #{tpu_custom_call.1} parent=63 // pred_fallthru
          _
      $region64: #{tpu_custom_call.1} parent=5 // pred_fallthru
        _
      %p447 = scmp.le.s32.totalorder 1, %s27
      %p448 = scmp.lt.s32.totalorder %s27, 3
      %p449 = pnand %p447, %p448
      %p450 = pneg %p449
      // Predicated region
      $region73: #{tpu_custom_call.1} parent=5 // pred_check
        _
      $region74: #{tpu_custom_call.1} parent=5 // pred_check_branch
        %452 = sbr.rel (%p449) target = $region76
      $region75: #{tpu_custom_call.1} parent=5 // pred_region
        %s453 = ssub.s32 %s27, 1
        %s454 = sand.u32 %s66, 1
        %s455 = scalar_lea.sflag [#allocation3], %s454
        %s456 = sand.u32 %s66, 1
        %s457 = scalar_lea.vmem [#allocation2], %s456
        // Predicated region
        $region77: #{tpu_custom_call.1} parent=75 // pred_check
          %p458 = pneg %p79
        $region78: #{tpu_custom_call.1} parent=75 // pred_check_branch
          %460 = sbr.rel (%p458) target = $region80
        $region79: #{tpu_custom_call.1} parent=75 // pred_region
          %462 = dma.done %s455, 16
        $region80: #{tpu_custom_call.1} parent=75 // pred_fallthru
          _
        // Predicated region
        $region81: #{tpu_custom_call.1} parent=75 // pred_check
          %p463 = pneg %p226
        $region82: #{tpu_custom_call.1} parent=75 // pred_check_branch
          %465 = sbr.rel (%p463) target = $region84
        $region83: #{tpu_custom_call.1} parent=75 // pred_region
          %467 = dma.done [#allocation6], 256
        $region84: #{tpu_custom_call.1} parent=75 // pred_fallthru
          _
        %p468 = scmp.lt.s32.totalorder %s32, 1
        %s469 = scalar_select %p468, %s32, 1
        %s470 = smul.addr %s469, 8
        %s471 = scalar_lea.vmem %s0, %s470
        %p472 = pneg %p53
        %p473 = pneg %p50
        %s474 = sand.u32 %s66, 1
        %s475 = scalar_lea.sflag [#allocation3], %s474
        %s476 = sand.u32 %s66, 1
        %s477 = scalar_lea.vmem [#allocation2], %s476
        %p478 = pneg %p79
        %p479 = pneg %p76
        %p480 = pneg %p100
        %p481 = pneg %p97
        %p482 = pneg %p121
        %p483 = pneg %p118
        %p484 = pneg %p142
        %p485 = pneg %p139
        %p486 = pneg %p163
        %p487 = pneg %p160
        %p488 = pneg %p184
        %p489 = pneg %p181
        %p490 = pneg %p205
        %p491 = pneg %p202
        %p492 = pneg %p226
        %p493 = pneg %p223
        %p494 = pneg %p247
        %p495 = pneg %p244
        %p496 = pneg %p268
        %p497 = pneg %p265
        %p498 = pneg %p289
        %p499 = pneg %p286
        %p500 = pneg %p310
        %p501 = pneg %p307
        %p502 = pneg %p331
        %p503 = pneg %p328
        %p504 = pneg %p357
        %p505 = pneg %p354
        %s506 = sand.u32 %s344, 1
        %s507 = scalar_lea.sflag [#allocation4], %s506
        %s508 = sand.u32 %s344, 1
        %s509 = smul.addr %s508, 8
        %s510 = scalar_lea.vmem [#allocation7], %s509
        %p511 = scmp.lt.s32.totalorder %s32, 1
        %s512 = scalar_select %p511, %s32, 1
        %s513 = smul.addr %s512, 8
        %s514 = scalar_lea.vmem %s0, %s513
        %v516 = vld [vmem:[%s514] sm:$0xff]
        %v517 = vld [vmem:[%s457] sm:$0x1]
        %v518 = vpack.c.bf16 %v516, %v516
        %v519 = vld [vmem:[%s2] sm:$0xf]
        %v520 = vld [vmem:[%s2 + $0x4] sm:$0xf]
        %v521 = vld [vmem:[%s2 + $0x8] sm:$0xf]
        %v522 = vld [vmem:[%s2 + $0xc] sm:$0xf]
        %v523 = vld [vmem:[%s3] sm:$0x1]
        %v525 = vperm.slane %v523, 0
        %v531 = vunpack.c.l.b16 %v519
        %v532 = vunpack.c.l.b16 %v520
        %v533 = vunpack.c.l.b16 %v521
        %v534 = vunpack.c.l.b16 %v522
        %v535 = vpack.c.b16 %v532, %v531
        %v536 = vpack.c.b16 %v534, %v533
        %vm539 = vcmask 261120
        %v541 = vsel %vm539, %v518, 0
        %543 = vmatpush.bf16.msra.mxu0 0
        %544 = vmatpush.bf16.msra.mxu0 0
        %545 = vmatpush.bf16.msra.mxu0 0
        %546 = vmatpush.bf16.msra.mxu0 0
        %547 = vmatpush.bf16.msra.mxu0 0
        %548 = vmatpush.bf16.msra.mxu0 0
        %549 = vmatpush.bf16.msra.mxu0 %v536
        %550 = vmatpush.bf16.msra.mxu0 %v535
        %551 = vmatmul.bf16.gmra.mxu0 %v541
        %v552 = vpop.f32.mrf.mxu0
        %v553 = vadd.f32 %v525, %v552
        %v554 = vpop.f32.mrf.mxu0
        %555 = vdwg.mxu0
        %v556 = vpack.c.bf16 %v553, %v553
        %v558 = vperm.slane %v517, 0
        %561 = vrot.lane.b32.xlu0 %v556, 96
        %v562 = vpop.permute.xlu0 %561
        %vm563 = vcmask 64512
        %v565 = vsel %vm563, %v556, 0
        %v568 = vsel %vm563, %v562, 0
        %570 = vmatpush.bf16.xpose.msra.mxu0 0
        %571 = vmatpush.bf16.xpose.msra.mxu0 0
        %572 = vmatpush.bf16.xpose.msra.mxu0 0
        %573 = vmatpush.bf16.xpose.msra.mxu0 0
        %574 = vmatpush.bf16.xpose.msra.mxu0 0
        %575 = vmatpush.bf16.xpose.msra.mxu0 0
        %576 = vmatpush.bf16.xpose.msra.mxu0 0
        %577 = vmatpush.bf16.xpose.msra.mxu0 %v568
        %578 = vmatmul.bf16.gmra.mxu0 %v565
        %v579 = vpop.f32.mrf.mxu0
        %v580 = vadd.f32 %v558, %v579
        %v581 = vpop.f32.mrf.mxu0
        %582 = vdwg.mxu0
        %v583 = vsel %vm563, %v580, -inf
        %584 = vmax.xlane.f32.xlu0 %v583
        %v585 = vpop.xlane.xlu0 %584
        %v586 = vsub.f32 %v580, %v585
        %v587 = vmul.f32 %v586, 1.442695
        %v588 = vpow.pop %v587
        %v589 = vsel %vm563, %v588, 0.0
        %590 = vadd.xlane.f32.xlu0 %v589
        %v591 = vpop.xlane.xlu0 %590
        %v592 = vrcp.pop %v591
        %v593 = vmul.f32 %v588, %v592
        %v594 = vpack.c.bf16 %v593, %v593
        %595 = vrot.lane.b32.xlu0 %v556, 64
        %v596 = vpop.permute.xlu0 %595
        %v598 = vsel %vm563, %v594, 0
        %vm600 = vcmask 1043456
        %v602 = vsel %vm600, %v596, 0
        %604 = vmatpush.bf16.msra.mxu0 0
        %605 = vmatpush.bf16.msra.mxu0 0
        %606 = vmatpush.bf16.msra.mxu0 0
        %607 = vmatpush.bf16.msra.mxu0 0
        %608 = vmatpush.bf16.msra.mxu0 0
        %609 = vmatpush.bf16.msra.mxu0 0
        %610 = vmatpush.bf16.msra.mxu0 0
        %611 = vmatpush.bf16.msra.mxu0 %v602
        %612 = vmatmul.bf16.gmra.mxu0 %v598
        %v613 = vpop.f32.mrf.mxu0
        %v614 = vadd.f32 0.0, %v613
        %v615 = vpop.f32.mrf.mxu0
        %616 = vdwg.mxu0
        %617 = vrot.lane.b32.xlu0 %v556, 120
        %v618 = vpop.permute.xlu0 %617
        %619 = vrot.lane.b32.xlu0 %v556, 88
        %v620 = vpop.permute.xlu0 %619
        %v622 = vsel %vm563, %v618, 0
        %v625 = vsel %vm563, %v620, 0
        %627 = vmatpush.bf16.xpose.msra.mxu0 0
        %628 = vmatpush.bf16.xpose.msra.mxu0 0
        %629 = vmatpush.bf16.xpose.msra.mxu0 0
        %630 = vmatpush.bf16.xpose.msra.mxu0 0
        %631 = vmatpush.bf16.xpose.msra.mxu0 0
        %632 = vmatpush.bf16.xpose.msra.mxu0 0
        %633 = vmatpush.bf16.xpose.msra.mxu0 0
        %634 = vmatpush.bf16.xpose.msra.mxu0 %v625
        %635 = vmatmul.bf16.gmra.mxu0 %v622
        %v636 = vpop.f32.mrf.mxu0
        %v637 = vadd.f32 %v558, %v636
        %v638 = vpop.f32.mrf.mxu0
        %639 = vdwg.mxu0
        %v640 = vsel %vm563, %v637, -inf
        %641 = vmax.xlane.f32.xlu0 %v640
        %v642 = vpop.xlane.xlu0 %641
        %v643 = vsub.f32 %v637, %v642
        %v644 = vmul.f32 %v643, 1.442695
        %v645 = vpow.pop %v644
        %v646 = vsel %vm563, %v645, 0.0
        %647 = vadd.xlane.f32.xlu0 %v646
        %v648 = vpop.xlane.xlu0 %647
        %v649 = vrcp.pop %v648
        %v650 = vmul.f32 %v645, %v649
        %v651 = vpack.c.bf16 %v650, %v650
        %652 = vrot.lane.b32.xlu0 %v556, 56
        %v653 = vpop.permute.xlu0 %652
        %v655 = vsel %vm563, %v651, 0
        %v658 = vsel %vm600, %v653, 0
        %660 = vmatpush.bf16.msra.mxu0 0
        %661 = vmatpush.bf16.msra.mxu0 0
        %662 = vmatpush.bf16.msra.mxu0 0
        %663 = vmatpush.bf16.msra.mxu0 0
        %664 = vmatpush.bf16.msra.mxu0 0
        %665 = vmatpush.bf16.msra.mxu0 0
        %666 = vmatpush.bf16.msra.mxu0 0
        %667 = vmatpush.bf16.msra.mxu0 %v658
        %668 = vmatmul.bf16.gmra.mxu0 %v655
        %v669 = vpop.f32.mrf.mxu0
        %v670 = vadd.f32 0.0, %v669
        %v671 = vpop.f32.mrf.mxu0
        %672 = vdwg.mxu0
        %673 = vrot.lane.b32.xlu0 %v556, 112
        %v674 = vpop.permute.xlu0 %673
        %675 = vrot.lane.b32.xlu0 %v556, 80
        %v676 = vpop.permute.xlu0 %675
        %v678 = vsel %vm563, %v674, 0
        %v681 = vsel %vm563, %v676, 0
        %683 = vmatpush.bf16.xpose.msra.mxu0 0
        %684 = vmatpush.bf16.xpose.msra.mxu0 0
        %685 = vmatpush.bf16.xpose.msra.mxu0 0
        %686 = vmatpush.bf16.xpose.msra.mxu0 0
        %687 = vmatpush.bf16.xpose.msra.mxu0 0
        %688 = vmatpush.bf16.xpose.msra.mxu0 0
        %689 = vmatpush.bf16.xpose.msra.mxu0 0
        %690 = vmatpush.bf16.xpose.msra.mxu0 %v681
        %691 = vmatmul.bf16.gmra.mxu0 %v678
        %v692 = vpop.f32.mrf.mxu0
        %v693 = vadd.f32 %v558, %v692
        %v694 = vpop.f32.mrf.mxu0
        %695 = vdwg.mxu0
        %v696 = vsel %vm563, %v693, -inf
        %697 = vmax.xlane.f32.xlu0 %v696
        %v698 = vpop.xlane.xlu0 %697
        %v699 = vsub.f32 %v693, %v698
        %v700 = vmul.f32 %v699, 1.442695
        %v701 = vpow.pop %v700
        %v702 = vsel %vm563, %v701, 0.0
        %703 = vadd.xlane.f32.xlu0 %v702
        %v704 = vpop.xlane.xlu0 %703
        %v705 = vrcp.pop %v704
        %v706 = vmul.f32 %v701, %v705
        %v707 = vpack.c.bf16 %v706, %v706
        %708 = vrot.lane.b32.xlu0 %v556, 48
        %v709 = vpop.permute.xlu0 %708
        %v711 = vsel %vm563, %v707, 0
        %v714 = vsel %vm600, %v709, 0
        %716 = vmatpush.bf16.msra.mxu0 0
        %717 = vmatpush.bf16.msra.mxu0 0
        %718 = vmatpush.bf16.msra.mxu0 0
        %719 = vmatpush.bf16.msra.mxu0 0
        %720 = vmatpush.bf16.msra.mxu0 0
        %721 = vmatpush.bf16.msra.mxu0 0
        %722 = vmatpush.bf16.msra.mxu0 0
        %723 = vmatpush.bf16.msra.mxu0 %v714
        %724 = vmatmul.bf16.gmra.mxu0 %v711
        %v725 = vpop.f32.mrf.mxu0
        %v726 = vadd.f32 0.0, %v725
        %v727 = vpop.f32.mrf.mxu0
        %728 = vdwg.mxu0
        %729 = vrot.lane.b32.xlu0 %v556, 104
        %v730 = vpop.permute.xlu0 %729
        %731 = vrot.lane.b32.xlu0 %v556, 72
        %v732 = vpop.permute.xlu0 %731
        %v734 = vsel %vm563, %v730, 0
        %v737 = vsel %vm563, %v732, 0
        %739 = vmatpush.bf16.xpose.msra.mxu0 0
        %740 = vmatpush.bf16.xpose.msra.mxu0 0
        %741 = vmatpush.bf16.xpose.msra.mxu0 0
        %742 = vmatpush.bf16.xpose.msra.mxu0 0
        %743 = vmatpush.bf16.xpose.msra.mxu0 0
        %744 = vmatpush.bf16.xpose.msra.mxu0 0
        %745 = vmatpush.bf16.xpose.msra.mxu0 0
        %746 = vmatpush.bf16.xpose.msra.mxu0 %v737
        %747 = vmatmul.bf16.gmra.mxu0 %v734
        %v748 = vpop.f32.mrf.mxu0
        %v749 = vadd.f32 %v558, %v748
        %v750 = vpop.f32.mrf.mxu0
        %751 = vdwg.mxu0
        %v752 = vsel %vm563, %v749, -inf
        %753 = vmax.xlane.f32.xlu0 %v752
        %v754 = vpop.xlane.xlu0 %753
        %v755 = vsub.f32 %v749, %v754
        %v756 = vmul.f32 %v755, 1.442695
        %v757 = vpow.pop %v756
        %v758 = vsel %vm563, %v757, 0.0
        %759 = vadd.xlane.f32.xlu0 %v758
        %v760 = vpop.xlane.xlu0 %759
        %v761 = vrcp.pop %v760
        %v762 = vmul.f32 %v757, %v761
        %v763 = vpack.c.bf16 %v762, %v762
        %764 = vrot.lane.b32.xlu0 %v556, 40
        %v765 = vpop.permute.xlu0 %764
        %v767 = vsel %vm563, %v763, 0
        %v770 = vsel %vm600, %v765, 0
        %772 = vmatpush.bf16.msra.mxu0 0
        %773 = vmatpush.bf16.msra.mxu0 0
        %774 = vmatpush.bf16.msra.mxu0 0
        %775 = vmatpush.bf16.msra.mxu0 0
        %776 = vmatpush.bf16.msra.mxu0 0
        %777 = vmatpush.bf16.msra.mxu0 0
        %778 = vmatpush.bf16.msra.mxu0 0
        %779 = vmatpush.bf16.msra.mxu0 %v770
        %780 = vmatmul.bf16.gmra.mxu0 %v767
        %v781 = vpop.f32.mrf.mxu0
        %v782 = vadd.f32 0.0, %v781
        %v783 = vpop.f32.mrf.mxu0
        %784 = vdwg.mxu0
        %786 = vrot.lane.b32.xlu0 %v670, 8
        %v787 = vpop.permute.xlu0 %786
        %790 = vrot.lane.b32.xlu0 %v726, 16
        %v791 = vpop.permute.xlu0 %790
        %794 = vrot.lane.b32.xlu0 %v782, 24
        %v795 = vpop.permute.xlu0 %794
        %v797 = vsel %vm563, %v614, %v787
        %vm798 = vcmask 130048
        %v799 = vsel %vm798, %v797, %v791
        %vm800 = vcmask 195584
        %v801 = vsel %vm800, %v799, %v795
        %v802 = vpack.c.bf16 %v801, %v801
        %v803 = vld [vmem:[%s4] sm:$0xf]
        %v804 = vld [vmem:[%s4 + $0x4] sm:$0xf]
        %v805 = vld [vmem:[%s4 + $0x8] sm:$0xf]
        %v806 = vld [vmem:[%s4 + $0xc] sm:$0xf]
        %v807 = vld [vmem:[%s5] sm:$0x1]
        %v809 = vperm.slane %v807, 0
        %v815 = vunpack.c.l.b16 %v803
        %v816 = vunpack.c.l.b16 %v804
        %v817 = vunpack.c.l.b16 %v805
        %v818 = vunpack.c.l.b16 %v806
        %v819 = vpack.c.b16 %v816, %v815
        %v820 = vpack.c.b16 %v818, %v817
        %v824 = vsel %vm539, %v802, 0
        %826 = vmatpush.bf16.msra.mxu0 0
        %827 = vmatpush.bf16.msra.mxu0 0
        %828 = vmatpush.bf16.msra.mxu0 0
        %829 = vmatpush.bf16.msra.mxu0 0
        %830 = vmatpush.bf16.msra.mxu0 0
        %831 = vmatpush.bf16.msra.mxu0 0
        %832 = vmatpush.bf16.msra.mxu0 %v820
        %833 = vmatpush.bf16.msra.mxu0 %v819
        %834 = vmatmul.bf16.gmra.mxu0 %v824
        %v835 = vpop.f32.mrf.mxu0
        %v836 = vadd.f32 %v809, %v835
        %v837 = vpop.f32.mrf.mxu0
        %838 = vdwg.mxu0
        %v839 = vadd.f32 %v516, %v836
        %v840 = vld [vmem:[%s6] sm:$0x1]
        %v841 = vld [vmem:[%s7] sm:$0x1]
        %v842 = vsel %vm539, %v839, 0.0
        %843 = vadd.xlane.f32.xlu0 %v842
        %v844 = vpop.xlane.xlu0 %843
        %v845 = vrcp.pop 32.0
        %v846 = vmul.f32 32.0, %v845
        %v847 = vsub.f32 1.0, %v846
        %v848 = vmul.f32 %v845, %v847
        %v849 = vadd.f32 %v845, %v848
        %vm850 = vweird.f32 %v845
        %v851 = vsel %vm850, %v845, %v849
        %v852 = vmul.f32 %v844, %v851
        %v853 = vsub.f32 %v839, %v852
        %v854 = vmul.f32 %v853, %v853
        %v855 = vsel %vm539, %v854, 0.0
        %856 = vadd.xlane.f32.xlu0 %v855
        %v857 = vpop.xlane.xlu0 %856
        %v858 = vmul.f32 %v857, %v851
        %v859 = vadd.f32 %v858, 1e-05
        %v860 = vrsqrt.pop %v859
        %v861 = vmul.f32 %v860, %v859
        %v862 = vmul.f32 %v861, %v860
        %v863 = vmul.f32 0.5, %v862
        %v864 = vsub.f32 1.5, %v863
        %v865 = vmul.f32 %v860, %v864
        %vm866 = vweird.f32 %v859
        %vm867 = vweird.f32 %v860
        %vm868 = vmor %vm866, %vm867
        %v869 = vsel %vm868, %v860, %v865
        %v870 = vmul.f32 %v853, %v869
        %v872 = vperm.slane %v840, 0
        %v874 = vmul.f32 %v870, %v872
        %v876 = vperm.slane %v841, 0
        %v878 = vadd.f32 %v874, %v876
        %v879 = vpack.c.bf16 %v878, %v878
        %v880 = vld [vmem:[#allocation5] sm:$0xf]
        %v881 = vld [vmem:[#allocation5 + $0x4] sm:$0xf]
        %v882 = vld [vmem:[#allocation5 + $0x8] sm:$0xf]
        %v883 = vld [vmem:[#allocation5 + $0xc] sm:$0xf]
        %v884 = vld [vmem:[%s9] sm:$0x1]
        %v886 = vperm.slane %v884, 0
        %v892 = vunpack.c.l.b16 %v880
        %v893 = vunpack.c.l.b16 %v881
        %v894 = vunpack.c.l.b16 %v882
        %v895 = vunpack.c.l.b16 %v883
        %v896 = vpack.c.b16 %v893, %v892
        %v897 = vpack.c.b16 %v895, %v894
        %v901 = vsel %vm539, %v879, 0
        %903 = vmatpush.bf16.msra.mxu0 0
        %904 = vmatpush.bf16.msra.mxu0 0
        %905 = vmatpush.bf16.msra.mxu0 0
        %906 = vmatpush.bf16.msra.mxu0 0
        %907 = vmatpush.bf16.msra.mxu0 0
        %908 = vmatpush.bf16.msra.mxu0 0
        %909 = vmatpush.bf16.msra.mxu0 %v897
        %910 = vmatpush.bf16.msra.mxu0 %v896
        %911 = vmatmul.bf16.gmra.mxu0 %v901
        %v912 = vpop.f32.mrf.mxu0
        %v913 = vadd.f32 %v886, %v912
        %v914 = vpop.f32.mrf.mxu0
        %915 = vdwg.mxu0
        %v916 = vmax.f32 %v913, 0.0
        %v917 = vpack.c.bf16 %v916, %v916
        %v918 = vld [vmem:[%s10] sm:$0xf]
        %v919 = vld [vmem:[%s10 + $0x4] sm:$0xf]
        %v920 = vld [vmem:[%s10 + $0x8] sm:$0xf]
        %v921 = vld [vmem:[%s10 + $0xc] sm:$0xf]
        %v922 = vld [vmem:[%s10 + $0x10] sm:$0xf]
        %v923 = vld [vmem:[%s10 + $0x14] sm:$0xf]
        %v924 = vld [vmem:[%s10 + $0x18] sm:$0xf]
        %v925 = vld [vmem:[%s10 + $0x1c] sm:$0xf]
        %v926 = vld [vmem:[%s11] sm:$0x1]
        %v928 = vperm.slane %v926, 0
        %v938 = vunpack.c.l.b16 %v918
        %v939 = vunpack.c.l.b16 %v919
        %v940 = vunpack.c.l.b16 %v920
        %v941 = vunpack.c.l.b16 %v921
        %v942 = vunpack.c.l.b16 %v922
        %v943 = vunpack.c.l.b16 %v923
        %v944 = vunpack.c.l.b16 %v924
        %v945 = vunpack.c.l.b16 %v925
        %v946 = vpack.c.b16 %v939, %v938
        %v947 = vpack.c.b16 %v941, %v940
        %v948 = vpack.c.b16 %v943, %v942
        %v949 = vpack.c.b16 %v945, %v944
        %vm954 = vcmask 523264
        %v956 = vsel %vm954, %v917, 0
        %958 = vmatpush.bf16.msra.mxu0 0
        %959 = vmatpush.bf16.msra.mxu0 0
        %960 = vmatpush.bf16.msra.mxu0 0
        %961 = vmatpush.bf16.msra.mxu0 0
        %962 = vmatpush.bf16.msra.mxu0 %v949
        %963 = vmatpush.bf16.msra.mxu0 %v948
        %964 = vmatpush.bf16.msra.mxu0 %v947
        %965 = vmatpush.bf16.msra.mxu0 %v946
        %966 = vmatmul.bf16.gmra.mxu0 %v956
        %v967 = vpop.f32.mrf.mxu0
        %v968 = vadd.f32 %v928, %v967
        %v969 = vpop.f32.mrf.mxu0
        %970 = vdwg.mxu0
        %v971 = vadd.f32 %v878, %v968
        %v972 = vld [vmem:[%s12] sm:$0x1]
        %v973 = vld [vmem:[%s13] sm:$0x1]
        %v974 = vsel %vm539, %v971, 0.0
        %975 = vadd.xlane.f32.xlu0 %v974
        %v976 = vpop.xlane.xlu0 %975
        %v977 = vmul.f32 %v976, %v851
        %v978 = vsub.f32 %v971, %v977
        %v979 = vmul.f32 %v978, %v978
        %v980 = vsel %vm539, %v979, 0.0
        %981 = vadd.xlane.f32.xlu0 %v980
        %v982 = vpop.xlane.xlu0 %981
        %v983 = vmul.f32 %v982, %v851
        %v984 = vadd.f32 %v983, 1e-05
        %v985 = vrsqrt.pop %v984
        %v986 = vmul.f32 %v985, %v984
        %v987 = vmul.f32 %v986, %v985
        %v988 = vmul.f32 0.5, %v987
        %v989 = vsub.f32 1.5, %v988
        %v990 = vmul.f32 %v985, %v989
        %vm991 = vweird.f32 %v984
        %vm992 = vweird.f32 %v985
        %vm993 = vmor %vm991, %vm992
        %v994 = vsel %vm993, %v985, %v990
        %v995 = vmul.f32 %v978, %v994
        %v997 = vperm.slane %v972, 0
        %v999 = vmul.f32 %v995, %v997
        %v1001 = vperm.slane %v973, 0
        %v1003 = vadd.f32 %v999, %v1001
        %1004 = vst.msk [vmem:[%s510] sm:$0xff] %vm539, %v1003
        %s1005 = sand.u32 %s344, 1
        %s1006 = scalar_lea.sflag [#allocation4], %s1005
        %s1007 = sand.u32 %s344, 1
        %s1008 = smul.addr %s1007, 8
        %s1009 = scalar_lea.vmem [#allocation7], %s1008
        // Predicated region
        $region85: #{tpu_custom_call.1} parent=75 // pred_check
          %p1010 = pneg %p354
        $region86: #{tpu_custom_call.1} parent=75 // pred_check_branch
          %1012 = sbr.rel (%p1010) target = $region88
        $region87: #{tpu_custom_call.1} parent=75 // pred_region
          %1014 = vsyncadd %s1006, 0
          %s1015 = smul.addr %s32, 8
          %s1016 = scalar_lea.hbm %s14, %s1015
          %s1018 = sshll.u32 %s1009, 4
          %s1019 = int_to_ptr.vmem [resolvable:$true] %s1018
          %s1020 = sshll.u32 %s1016, 4
          %s1021 = int_to_ptr.hbm [resolvable:$true] %s1020
          %1023 = dma.vmem_to_hbm [thread:$0]  %s1019, 128, %s1021, %s1006
        $region88: #{tpu_custom_call.1} parent=75 // pred_fallthru
          _
      $region76: #{tpu_custom_call.1} parent=5 // pred_fallthru
        _
      %p1024 = scmp.le.s32.totalorder 2, %s27
      // Predicated region
      $region89: #{tpu_custom_call.1} parent=5 // pred_check
        %p1025 = pneg %p1024
      $region90: #{tpu_custom_call.1} parent=5 // pred_check_branch
        %1027 = sbr.rel (%p1025) target = $region92
      $region91: #{tpu_custom_call.1} parent=5 // pred_region
        %s1028 = ssub.s32 %s27, 2
        // Predicated region
        $region93: #{tpu_custom_call.1} parent=91 // pred_check
          %p1029 = pneg %p360
        $region94: #{tpu_custom_call.1} parent=91 // pred_check_branch
          %1031 = sbr.rel (%p1029) target = $region96
        $region95: #{tpu_custom_call.1} parent=91 // pred_region
          %s1032 = sand.u32 %s345, 1
          %s1033 = scalar_lea.sflag [#allocation4], %s1032
          %s1034 = sand.u32 %s345, 1
          %s1035 = smul.addr %s1034, 8
          %s1036 = scalar_lea.vmem [#allocation7], %s1035
          %1038 = dma.done %s1033, 128
        $region96: #{tpu_custom_call.1} parent=91 // pred_fallthru
          _
      $region92: #{tpu_custom_call.1} parent=5 // pred_fallthru
        _
    $region6: #{tpu_custom_call.1} parent=1 // loop_footer
      %s31 = sadd.s32 1, %s27
    $region7: #{tpu_custom_call.1} parent=1 // loop_footer_branch
      %26 = sbr.rel target = $region3
    $region8: #{tpu_custom_call.1} parent=1 // loop_exit
      _
    %1039 = vsyncpa [#allocation3], 1
    %s1040 = scalar_lea.sflag [#allocation3], 1
    %1041 = vsyncpa %s1040, 1
    %1042 = vsyncpa [#allocation6], 1
    %1043 = vsyncpa [#allocation4], 1
    %s1044 = scalar_lea.sflag [#allocation4], 1
    %1045 = vsyncpa %s1044, 1

</llo_original>
